<compile_context>
chip_gen: v7x
topology: tpu7x:2x2x1
jax: 0.10.0
libtpu: 0.0.40
codegen_flags: <defaults>
</compile_context>

<pallas_src>
import jax
import jax.numpy as jnp
from jax.experimental import pallas as pl
from jax.experimental.pallas import tpu as pltpu

INPUT_DIM = 54
HIDDEN_DIM = 512
OUTPUT_DIM = 18          # len(ALL_MOVES) -> standard Rubik's-cube move set
PAD_OUT = 128            # lane-aligned (zero-padded) output width


def _round_up(n, m):
    return ((n + m - 1) // m) * m


def _pad_to(a, shape):
    return jnp.pad(a, [(0, t - s) for s, t in zip(a.shape, shape)])


def _mlp_kernel(x_ref,
                w1_ref, b1_ref,
                w2_ref, b2_ref,
                w3_ref, b3_ref,
                w4_ref, b4_ref,
                out_ref):
    wdt = w1_ref.dtype      # bf16 (fast path) or f32 (exact path)
    # Exact path needs HIGHEST so the MXU does full-f32 (multi-pass) matmuls.
    prec = (jax.lax.Precision.HIGHEST if wdt == jnp.float32
            else jax.lax.Precision.DEFAULT)

    # x already arrives in the weight dtype (x = x.float() happened in the
    # wrapper via the cast); MXU accumulates in f32, bias-add/ReLU stay f32.
    x = x_ref[...]

    h = jnp.dot(x, w1_ref[...], precision=prec,
                preferred_element_type=jnp.float32) + b1_ref[...]
    h = jnp.maximum(h, 0.0).astype(wdt)      # store intermediate in wdt

    h = jnp.dot(h, w2_ref[...], precision=prec,
                preferred_element_type=jnp.float32) + b2_ref[...]
    h = jnp.maximum(h, 0.0).astype(wdt)

    h = jnp.dot(h, w3_ref[...], precision=prec,
                preferred_element_type=jnp.float32) + b3_ref[...]
    h = jnp.maximum(h, 0.0).astype(wdt)

    out_ref[...] = (jnp.dot(h, w4_ref[...], precision=prec,
                            preferred_element_type=jnp.float32) + b4_ref[...])


def prepare_params(params, weight_dtype=jnp.bfloat16):
    """Weights in weight_dtype (w4/b4 lane-padded 18->128); biases in f32."""
    w1, b1, w2, b2, w3, b3, w4, b4 = params
    w1p = w1.astype(weight_dtype)                                   # (54, 512) unpadded
    w2p = w2.astype(weight_dtype)
    w3p = w3.astype(weight_dtype)
    w4p = _pad_to(w4.astype(weight_dtype), (HIDDEN_DIM, PAD_OUT))   # pad N: 18 -> 128
    b1p = b1.astype(jnp.float32)
    b2p = b2.astype(jnp.float32)
    b3p = b3.astype(jnp.float32)
    b4p = _pad_to(b4.astype(jnp.float32), (1, PAD_OUT))
    return w1p, b1p, w2p, b2p, w3p, b3p, w4p, b4p


def larger_imitation_model(x, params, *, batch_tile=512,
                           weight_dtype=jnp.bfloat16):
    """Run the 4-layer MLP as a single fused Pallas kernel, tiled over batch."""
    B = x.shape[0]
    assert x.shape[1] == INPUT_DIM

    # Choose the batch tile: clamp for small B, then (for multi-tile grids)
    # force an even tile count so v7x's two TensorCores get equal work.
    bt = min(batch_tile, _round_up(B, 16))
    n_tiles = -(-B // bt)
    if n_tiles > 1 and n_tiles % 2 == 1:
        n_tiles += 1
        bt = _round_up(-(-B // n_tiles), 16)
    Bp = n_tiles * bt

    # Only the batch is padded (zero rows, sliced off below); x goes in the
    # weight dtype so the first matmul's cast happens once, outside the loop.
    xp = _pad_to(x.astype(weight_dtype), (Bp, INPUT_DIM))

    w1p, b1p, w2p, b2p, w3p, b3p, w4p, b4p = prepare_params(params, weight_dtype)

    def resident(shape):
        # Whole-array block with a constant index map: fetched once, then
        # resident in VMEM across all batch-grid steps.
        return pl.BlockSpec(shape, lambda i: (0, 0))

    grid = (n_tiles,)
    in_specs = [
        pl.BlockSpec((bt, INPUT_DIM), lambda i: (i, 0)),   # x tile (54 = full dim)
        resident(w1p.shape), resident(b1p.shape),
        resident(w2p.shape), resident(b2p.shape),
        resident(w3p.shape), resident(b3p.shape),
        resident(w4p.shape), resident(b4p.shape),
    ]
    out_spec = pl.BlockSpec((bt, PAD_OUT), lambda i: (i, 0))

    flops = 2 * Bp * (INPUT_DIM * HIDDEN_DIM
                      + 2 * HIDDEN_DIM * HIDDEN_DIM
                      + HIDDEN_DIM * PAD_OUT)
    bytes_accessed = (xp.size * xp.dtype.itemsize
                      + sum(a.size * a.dtype.itemsize
                            for a in (w1p, b1p, w2p, b2p, w3p, b3p, w4p, b4p))
                      + Bp * PAD_OUT * 4)

    out = pl.pallas_call(
        _mlp_kernel,
        out_shape=jax.ShapeDtypeStruct((Bp, PAD_OUT), jnp.float32),
        grid_spec=pltpu.PrefetchScalarGridSpec(
            num_scalar_prefetch=0,
            grid=grid,
            in_specs=in_specs,
            out_specs=out_spec,
        ),
        compiler_params=pltpu.CompilerParams(
            dimension_semantics=("parallel",),
            vmem_limit_bytes=32 * 1024 * 1024,
        ),
        cost_estimate=pl.CostEstimate(
            flops=flops, transcendentals=0, bytes_accessed=bytes_accessed),
    )(xp, w1p, b1p, w2p, b2p, w3p, b3p, w4p, b4p)

    return out[:B, :OUTPUT_DIM]


def init_params(key):
    """Deterministic init mimicking nn.Linear's uniform(-1/sqrt(fan_in), +).

    Weights are stored transposed vs. PyTorch ([in, out]) so y = x @ W + b.
    """
    dims = [(INPUT_DIM, HIDDEN_DIM),
            (HIDDEN_DIM, HIDDEN_DIM),
            (HIDDEN_DIM, HIDDEN_DIM),
            (HIDDEN_DIM, OUTPUT_DIM)]
    params = []
    for li, (fan_in, fan_out) in enumerate(dims):
        kw, kb = jax.random.split(jax.random.fold_in(key, li))
        bound = 1.0 / jnp.sqrt(jnp.float32(fan_in))
        w = jax.random.uniform(kw, (fan_in, fan_out), jnp.float32, -bound, bound)
        b = jax.random.uniform(kb, (1, fan_out), jnp.float32, -bound, bound)
        params += [w, b]
    return tuple(params)


def reference_forward_f32(x, params):
    """Pure-JAX reference in f32 (original module numerics, HIGHEST precision)."""
    w1, b1, w2, b2, w3, b3, w4, b4 = params
    hp = jax.lax.Precision.HIGHEST
    h = jnp.maximum(jnp.dot(x.astype(jnp.float32), w1, precision=hp) + b1, 0.0)
    h = jnp.maximum(jnp.dot(h, w2, precision=hp) + b2, 0.0)
    h = jnp.maximum(jnp.dot(h, w3, precision=hp) + b3, 0.0)
    return jnp.dot(h, w4, precision=hp) + b4


def reference_forward_quantized(x, params, weight_dtype):
    """Pure-JAX reference that mirrors the kernel's weight-dtype scheme."""
    w1, b1, w2, b2, w3, b3, w4, b4 = params

    def lin(h, w, b):
        return jnp.dot(h.astype(weight_dtype), w.astype(weight_dtype),
                       preferred_element_type=jnp.float32) + b.astype(jnp.float32)

    h = jnp.maximum(lin(x, w1, b1), 0.0)
    h = jnp.maximum(lin(h, w2, b2), 0.0)
    h = jnp.maximum(lin(h, w3, b3), 0.0)
    return lin(h, w4, b4)


if __name__ == "__main__":
    key = jax.random.PRNGKey(0)
    params = init_params(key)

    # Case 1: default fast path (bf16 weights + activations, f32 accumulation).
    B1 = 64
    x1 = jax.random.randint(jax.random.fold_in(key, 100),
                            (B1, INPUT_DIM), 0, 6).astype(jnp.float32)
    out1 = jax.block_until_ready(larger_imitation_model(x1, params))
    ref1 = reference_forward_quantized(x1, params, jnp.bfloat16)
    assert out1.shape == (B1, OUTPUT_DIM)
    assert jnp.allclose(out1, ref1, atol=3e-2, rtol=3e-2)

    # Case 2: exact f32 path (original module numerics via HIGHEST precision).
    B2 = 16
    x2 = jax.random.randint(jax.random.fold_in(key, 200),
                            (B2, INPUT_DIM), 0, 6).astype(jnp.float32)
    out2 = jax.block_until_ready(
        larger_imitation_model(x2, params, weight_dtype=jnp.float32))
    ref2 = reference_forward_f32(x2, params)
    assert out2.shape == (B2, OUTPUT_DIM)
    assert jnp.allclose(out2, ref2, atol=1e-3, rtol=1e-3)

    print("KERNEL_OK")
</pallas_src>

<mosaic_0001>
module attributes {stable_mosaic.version = 11 : i64} {
  func.func @_mlp_kernel(%arg0: i32, %arg1: memref<64x54xbf16, #tpu.memory_space<vmem>>, %arg2: memref<54x512xbf16, #tpu.memory_space<vmem>>, %arg3: memref<1x512xf32, #tpu.memory_space<vmem>>, %arg4: memref<512x512xbf16, #tpu.memory_space<vmem>>, %arg5: memref<1x512xf32, #tpu.memory_space<vmem>>, %arg6: memref<512x512xbf16, #tpu.memory_space<vmem>>, %arg7: memref<1x512xf32, #tpu.memory_space<vmem>>, %arg8: memref<512x128xbf16, #tpu.memory_space<vmem>>, %arg9: memref<1x128xf32, #tpu.memory_space<vmem>>, %arg10: memref<64x128xf32, #tpu.memory_space<vmem>>) attributes {dimension_semantics = [#tpu.dimension_semantics<parallel>], iteration_bounds = array<i64: 1>, scalar_prefetch = 0 : i64, scratch_operands = 0 : i64, tpu.core_type = #tpu.core_type<tc>, window_params = [{transform_indices = @transform_0, window_bounds = array<i64: 64, 54>}, {pipeline_mode = #tpu.pipeline_mode<synchronous>, transform_indices = @transform_1, window_bounds = array<i64: 54, 512>}, {pipeline_mode = #tpu.pipeline_mode<synchronous>, transform_indices = @transform_2, window_bounds = array<i64: 1, 512>}, {pipeline_mode = #tpu.pipeline_mode<synchronous>, transform_indices = @transform_3, window_bounds = array<i64: 512, 512>}, {pipeline_mode = #tpu.pipeline_mode<synchronous>, transform_indices = @transform_4, window_bounds = array<i64: 1, 512>}, {pipeline_mode = #tpu.pipeline_mode<synchronous>, transform_indices = @transform_5, window_bounds = array<i64: 512, 512>}, {pipeline_mode = #tpu.pipeline_mode<synchronous>, transform_indices = @transform_6, window_bounds = array<i64: 1, 512>}, {pipeline_mode = #tpu.pipeline_mode<synchronous>, transform_indices = @transform_7, window_bounds = array<i64: 512, 128>}, {pipeline_mode = #tpu.pipeline_mode<synchronous>, transform_indices = @transform_8, window_bounds = array<i64: 1, 128>}, {transform_indices = @transform_9, window_bounds = array<i64: 64, 128>}]} {
    %c0 = arith.constant 0 : index
    %c0_0 = arith.constant 0 : index
    %0 = vector.load %arg1[%c0, %c0_0] : memref<64x54xbf16, #tpu.memory_space<vmem>>, vector<64x54xbf16>
    %c0_1 = arith.constant 0 : index
    %c0_2 = arith.constant 0 : index
    %1 = vector.load %arg2[%c0_1, %c0_2] : memref<54x512xbf16, #tpu.memory_space<vmem>>, vector<54x512xbf16>
    %cst = arith.constant dense<0.000000e+00> : vector<64x512xf32>
    %2 = tpu.matmul %0, %1, %cst {dimension_numbers = #tpu.dot_dimension_numbers<[1], [0], [0], [1], [0, 0, 1, 1], [], []>} : vector<64x54xbf16>, vector<54x512xbf16>, vector<64x512xf32> -> vector<64x512xf32>
    %c0_3 = arith.constant 0 : index
    %c0_4 = arith.constant 0 : index
    %3 = vector.load %arg3[%c0_3, %c0_4] : memref<1x512xf32, #tpu.memory_space<vmem>>, vector<1x512xf32>
    %4 = vector.broadcast %3 : vector<1x512xf32> to vector<64x512xf32>
    %5 = arith.addf %2, %4 : vector<64x512xf32>
    %cst_5 = arith.constant 0.000000e+00 : f32
    %6 = vector.broadcast %cst_5 : f32 to vector<64x512xf32>
    %7 = arith.maximumf %5, %6 : vector<64x512xf32>
    %8 = arith.truncf %7 : vector<64x512xf32> to vector<64x512xbf16>
    %c0_6 = arith.constant 0 : index
    %c0_7 = arith.constant 0 : index
    %9 = vector.load %arg4[%c0_6, %c0_7] : memref<512x512xbf16, #tpu.memory_space<vmem>>, vector<512x512xbf16>
    %cst_8 = arith.constant dense<0.000000e+00> : vector<64x512xf32>
    %10 = tpu.matmul %8, %9, %cst_8 {dimension_numbers = #tpu.dot_dimension_numbers<[1], [0], [0], [1], [0, 0, 1, 1], [], []>} : vector<64x512xbf16>, vector<512x512xbf16>, vector<64x512xf32> -> vector<64x512xf32>
    %c0_9 = arith.constant 0 : index
    %c0_10 = arith.constant 0 : index
    %11 = vector.load %arg5[%c0_9, %c0_10] : memref<1x512xf32, #tpu.memory_space<vmem>>, vector<1x512xf32>
    %12 = vector.broadcast %11 : vector<1x512xf32> to vector<64x512xf32>
    %13 = arith.addf %10, %12 : vector<64x512xf32>
    %cst_11 = arith.constant 0.000000e+00 : f32
    %14 = vector.broadcast %cst_11 : f32 to vector<64x512xf32>
    %15 = arith.maximumf %13, %14 : vector<64x512xf32>
    %16 = arith.truncf %15 : vector<64x512xf32> to vector<64x512xbf16>
    %c0_12 = arith.constant 0 : index
    %c0_13 = arith.constant 0 : index
    %17 = vector.load %arg6[%c0_12, %c0_13] : memref<512x512xbf16, #tpu.memory_space<vmem>>, vector<512x512xbf16>
    %cst_14 = arith.constant dense<0.000000e+00> : vector<64x512xf32>
    %18 = tpu.matmul %16, %17, %cst_14 {dimension_numbers = #tpu.dot_dimension_numbers<[1], [0], [0], [1], [0, 0, 1, 1], [], []>} : vector<64x512xbf16>, vector<512x512xbf16>, vector<64x512xf32> -> vector<64x512xf32>
    %c0_15 = arith.constant 0 : index
    %c0_16 = arith.constant 0 : index
    %19 = vector.load %arg7[%c0_15, %c0_16] : memref<1x512xf32, #tpu.memory_space<vmem>>, vector<1x512xf32>
    %20 = vector.broadcast %19 : vector<1x512xf32> to vector<64x512xf32>
    %21 = arith.addf %18, %20 : vector<64x512xf32>
    %cst_17 = arith.constant 0.000000e+00 : f32
    %22 = vector.broadcast %cst_17 : f32 to vector<64x512xf32>
    %23 = arith.maximumf %21, %22 : vector<64x512xf32>
    %24 = arith.truncf %23 : vector<64x512xf32> to vector<64x512xbf16>
    %c0_18 = arith.constant 0 : index
    %c0_19 = arith.constant 0 : index
    %25 = vector.load %arg8[%c0_18, %c0_19] : memref<512x128xbf16, #tpu.memory_space<vmem>>, vector<512x128xbf16>
    %cst_20 = arith.constant dense<0.000000e+00> : vector<64x128xf32>
    %26 = tpu.matmul %24, %25, %cst_20 {dimension_numbers = #tpu.dot_dimension_numbers<[1], [0], [0], [1], [0, 0, 1, 1], [], []>} : vector<64x512xbf16>, vector<512x128xbf16>, vector<64x128xf32> -> vector<64x128xf32>
    %c0_21 = arith.constant 0 : index
    %c0_22 = arith.constant 0 : index
    %27 = vector.load %arg9[%c0_21, %c0_22] : memref<1x128xf32, #tpu.memory_space<vmem>>, vector<1x128xf32>
    %28 = vector.broadcast %27 : vector<1x128xf32> to vector<64x128xf32>
    %29 = arith.addf %26, %28 : vector<64x128xf32>
    %c0_23 = arith.constant 0 : index
    %c0_24 = arith.constant 0 : index
    %30 = vector.load %arg10[%c0_23, %c0_24] : memref<64x128xf32, #tpu.memory_space<vmem>>, vector<64x128xf32>
    tpu.vector_store %arg10[%c0_23, %c0_24], %29 {strides = array<i32>} : memref<64x128xf32, #tpu.memory_space<vmem>>, vector<64x128xf32>,
    return
  }
  func.func @transform_0(%arg0: i32) -> (i32, i32) {
    %c0_i32 = arith.constant 0 : i32
    %c0_i32_0 = arith.constant 0 : i32
    return %arg0, %c0_i32 : i32, i32
  }
  func.func @transform_1(%arg0: i32) -> (i32, i32) {
    %c0_i32 = arith.constant 0 : i32
    %c0_i32_0 = arith.constant 0 : i32
    %c0_i32_1 = arith.constant 0 : i32
    return %c0_i32, %c0_i32_0 : i32, i32
  }
  func.func @transform_2(%arg0: i32) -> (i32, i32) {
    %c0_i32 = arith.constant 0 : i32
    %c0_i32_0 = arith.constant 0 : i32
    %c0_i32_1 = arith.constant 0 : i32
    return %c0_i32, %c0_i32_0 : i32, i32
  }
  func.func @transform_3(%arg0: i32) -> (i32, i32) {
    %c0_i32 = arith.constant 0 : i32
    %c0_i32_0 = arith.constant 0 : i32
    %c0_i32_1 = arith.constant 0 : i32
    return %c0_i32, %c0_i32_0 : i32, i32
  }
  func.func @transform_4(%arg0: i32) -> (i32, i32) {
    %c0_i32 = arith.constant 0 : i32
    %c0_i32_0 = arith.constant 0 : i32
    %c0_i32_1 = arith.constant 0 : i32
    return %c0_i32, %c0_i32_0 : i32, i32
  }
  func.func @transform_5(%arg0: i32) -> (i32, i32) {
    %c0_i32 = arith.constant 0 : i32
    %c0_i32_0 = arith.constant 0 : i32
    %c0_i32_1 = arith.constant 0 : i32
    return %c0_i32, %c0_i32_0 : i32, i32
  }
  func.func @transform_6(%arg0: i32) -> (i32, i32) {
    %c0_i32 = arith.constant 0 : i32
    %c0_i32_0 = arith.constant 0 : i32
    %c0_i32_1 = arith.constant 0 : i32
    return %c0_i32, %c0_i32_0 : i32, i32
  }
  func.func @transform_7(%arg0: i32) -> (i32, i32) {
    %c0_i32 = arith.constant 0 : i32
    %c0_i32_0 = arith.constant 0 : i32
    %c0_i32_1 = arith.constant 0 : i32
    return %c0_i32, %c0_i32_0 : i32, i32
  }
  func.func @transform_8(%arg0: i32) -> (i32, i32) {
    %c0_i32 = arith.constant 0 : i32
    %c0_i32_0 = arith.constant 0 : i32
    %c0_i32_1 = arith.constant 0 : i32
    return %c0_i32, %c0_i32_0 : i32, i32
  }
  func.func @transform_9(%arg0: i32) -> (i32, i32) {
    %c0_i32 = arith.constant 0 : i32
    %c0_i32_0 = arith.constant 0 : i32
    return %arg0, %c0_i32 : i32, i32
  }
}

</mosaic_0001>

<llo_original>
// kernel: tpu_custom_call.1
$region0: #{tpu_custom_call.1}
  #allocation0 [shape = 'u32[]', space=smem, size = 0x4, offset = 0x4, fixed_abs, tag = 'smem constant byte address 0x4 - core index']
  #allocation1 [shape = 'u32[144,128]{1,0:T(1,128)}', space=vmem, size = 0x12000, scoped, tag = 'internal scratch']
  %s0 = inlined_call_operand.vmem [shape: bf16[64,54], index: 0, kind: input, shape index: {}]
  %s1 = inlined_call_operand.hbm [shape: bf16[54,512], index: 1, kind: input, shape index: {}]
  %s2 = inlined_call_operand.vmem [shape: f32[1,512], index: 2, kind: input, shape index: {}]
  %s3 = inlined_call_operand.hbm [shape: bf16[512,512], index: 3, kind: input, shape index: {}]
  %s4 = inlined_call_operand.vmem [shape: f32[1,512], index: 4, kind: input, shape index: {}]
  %s5 = inlined_call_operand.hbm [shape: bf16[512,512], index: 5, kind: input, shape index: {}]
  %s6 = inlined_call_operand.vmem [shape: f32[1,512], index: 6, kind: input, shape index: {}]
  %s7 = inlined_call_operand.hbm [shape: bf16[512,128], index: 7, kind: input, shape index: {}]
  %s8 = inlined_call_operand.vmem [shape: f32[1,128], index: 8, kind: input, shape index: {}]
  %s9 = inlined_call_operand.hbm [shape: f32[64,128], index: 9, kind: output, shape index: {}]
  %s10 = sld [smem:[#allocation0]]
  $region62: #{tpu_custom_call.1} parent=0
    _
  %s12 = ssub.s32 1, %s10
  %s13 = scalar_select 0, %s12, %s10
  $region1: #{tpu_custom_call.1} parent=0
    #allocation2 [shape = 'u8[57344]{0}', space=vmem, size = 0xe000, scoped, tag = 'input window, operand 1, single buffered']
    #allocation3 [shape = 's32[1]{0}', space=sflag, size = 0x4, scoped, tag = 'scoped memory for tpu_custom_call.1']
    #allocation4 [shape = 's32[1]{0}', space=sflag, size = 0x4, scoped, tag = 'scoped memory for tpu_custom_call.1']
    #allocation5 [shape = 'u8[524288]{0}', space=vmem, size = 0x80000, scoped, tag = 'input window, operand 3, single buffered']
    #allocation6 [shape = 's32[1]{0}', space=sflag, size = 0x4, scoped, tag = 'scoped memory for tpu_custom_call.1']
    #allocation7 [shape = 'u8[524288]{0}', space=vmem, size = 0x80000, scoped, tag = 'input window, operand 5, single buffered']
    #allocation8 [shape = 'u8[131072]{0}', space=vmem, size = 0x20000, scoped, tag = 'input window, operand 7, single buffered']
    #allocation9 [shape = 's32[1]{0}', space=sflag, size = 0x4, scoped, tag = 'scoped memory for tpu_custom_call.1']
    #allocation10 [shape = 'u8[32768]{0}', space=vmem, size = 0x8000, scoped, tag = 'output window, operand 0, single buffered']
    %14 = vsyncpa [#allocation3], 0
    %15 = vsyncpa [#allocation6], 0
    %16 = vsyncpa [#allocation9], 0
    %17 = vsyncpa [#allocation4], 0
    // Predicated region
    $region2: #{tpu_custom_call.1} parent=1 // pred_check
      _
    $region3: #{tpu_custom_call.1} parent=1 // pred_check_branch
      %19 = sbr.rel (0) target = $region5
    $region4: #{tpu_custom_call.1} parent=1 // pred_region
      _
    $region5: #{tpu_custom_call.1} parent=1 // pred_fallthru
      _
    // Predicated region
    $region6: #{tpu_custom_call.1} parent=1 // pred_check
      _
    $region7: #{tpu_custom_call.1} parent=1 // pred_check_branch
      %21 = sbr.rel (0) target = $region9
    $region8: #{tpu_custom_call.1} parent=1 // pred_region
      %s23 = ssub.s32 1792, 1792
      %24 = vsyncadd [#allocation3], %s23
      %s25 = sshll.u32 [#allocation2], 4
      %s26 = int_to_ptr.vmem [resolvable:$true] %s25
      %31 = dma.hbm_to_vmem [thread:$0]  %s1, 1792, %s26, [#allocation3], 256, 256, 16
    $region9: #{tpu_custom_call.1} parent=1 // pred_fallthru
      _
    // Predicated region
    $region10: #{tpu_custom_call.1} parent=1 // pred_check
      _
    $region11: #{tpu_custom_call.1} parent=1 // pred_check_branch
      %33 = sbr.rel (0) target = $region13
    $region12: #{tpu_custom_call.1} parent=1 // pred_region
      _
    $region13: #{tpu_custom_call.1} parent=1 // pred_fallthru
      _
    // Predicated region
    $region14: #{tpu_custom_call.1} parent=1 // pred_check
      _
    $region15: #{tpu_custom_call.1} parent=1 // pred_check_branch
      %35 = sbr.rel (0) target = $region17
    $region16: #{tpu_custom_call.1} parent=1 // pred_region
      %s37 = ssub.s32 16384, 16384
      %38 = vsyncadd [#allocation6], %s37
      %s39 = sshll.u32 [#allocation5], 4
      %s40 = int_to_ptr.vmem [resolvable:$true] %s39
      %45 = dma.hbm_to_vmem [thread:$0]  %s3, 16384, %s40, [#allocation6], 256, 256, 16
    $region17: #{tpu_custom_call.1} parent=1 // pred_fallthru
      _
    // Predicated region
    $region18: #{tpu_custom_call.1} parent=1 // pred_check
      _
    $region19: #{tpu_custom_call.1} parent=1 // pred_check_branch
      %47 = sbr.rel (0) target = $region21
    $region20: #{tpu_custom_call.1} parent=1 // pred_region
      _
    $region21: #{tpu_custom_call.1} parent=1 // pred_fallthru
      _
    // Predicated region
    $region22: #{tpu_custom_call.1} parent=1 // pred_check
      _
    $region23: #{tpu_custom_call.1} parent=1 // pred_check_branch
      %49 = sbr.rel (0) target = $region25
    $region24: #{tpu_custom_call.1} parent=1 // pred_region
      %s51 = ssub.s32 16384, 16384
      %52 = vsyncadd [#allocation6], %s51
      %s53 = sshll.u32 [#allocation7], 4
      %s54 = int_to_ptr.vmem [resolvable:$true] %s53
      %59 = dma.hbm_to_vmem [thread:$0]  %s5, 16384, %s54, [#allocation6], 256, 256, 16
    $region25: #{tpu_custom_call.1} parent=1 // pred_fallthru
      _
    // Predicated region
    $region26: #{tpu_custom_call.1} parent=1 // pred_check
      _
    $region27: #{tpu_custom_call.1} parent=1 // pred_check_branch
      %61 = sbr.rel (0) target = $region29
    $region28: #{tpu_custom_call.1} parent=1 // pred_region
      _
    $region29: #{tpu_custom_call.1} parent=1 // pred_fallthru
      _
    // Predicated region
    $region30: #{tpu_custom_call.1} parent=1 // pred_check
      _
    $region31: #{tpu_custom_call.1} parent=1 // pred_check_branch
      %63 = sbr.rel (0) target = $region33
    $region32: #{tpu_custom_call.1} parent=1 // pred_region
      %s65 = ssub.s32 4096, 4096
      %66 = vsyncadd [#allocation9], %s65
      %s67 = sshll.u32 [#allocation8], 4
      %s68 = int_to_ptr.vmem [resolvable:$true] %s67
      %73 = dma.hbm_to_vmem [thread:$0]  %s7, 4096, %s68, [#allocation9], 64, 64, 4
    $region33: #{tpu_custom_call.1} parent=1 // pred_fallthru
      _
    // Predicated region
    $region34: #{tpu_custom_call.1} parent=1 // pred_check
      _
    $region35: #{tpu_custom_call.1} parent=1 // pred_check_branch
      %75 = sbr.rel (0) target = $region37
    $region36: #{tpu_custom_call.1} parent=1 // pred_region
      _
    $region37: #{tpu_custom_call.1} parent=1 // pred_fallthru
      _
    // Predicated region
    $region38: #{tpu_custom_call.1} parent=1 // pred_check
      _
    $region39: #{tpu_custom_call.1} parent=1 // pred_check_branch
      %77 = sbr.rel (0) target = $region41
    $region40: #{tpu_custom_call.1} parent=1 // pred_region
      %78 = dma.done [#allocation3], 1792
    $region41: #{tpu_custom_call.1} parent=1 // pred_fallthru
      _
    // Predicated region
    $region42: #{tpu_custom_call.1} parent=1 // pred_check
      _
    $region43: #{tpu_custom_call.1} parent=1 // pred_check_branch
      %80 = sbr.rel (0) target = $region45
    $region44: #{tpu_custom_call.1} parent=1 // pred_region
      %81 = dma.done [#allocation6], 16384
    $region45: #{tpu_custom_call.1} parent=1 // pred_fallthru
      _
    // Predicated region
    $region46: #{tpu_custom_call.1} parent=1 // pred_check
      _
    $region47: #{tpu_custom_call.1} parent=1 // pred_check_branch
      %83 = sbr.rel (0) target = $region49
    $region48: #{tpu_custom_call.1} parent=1 // pred_region
      %84 = dma.done [#allocation6], 16384
    $region49: #{tpu_custom_call.1} parent=1 // pred_fallthru
      _
    // Predicated region
    $region50: #{tpu_custom_call.1} parent=1 // pred_check
      _
    $region51: #{tpu_custom_call.1} parent=1 // pred_check_branch
      %86 = sbr.rel (0) target = $region53
    $region52: #{tpu_custom_call.1} parent=1 // pred_region
      %87 = dma.done [#allocation9], 4096
    $region53: #{tpu_custom_call.1} parent=1 // pred_fallthru
      _
    %v89 = vld [vmem:[%s0] sm:$0xf]
    %v90 = vld [vmem:[%s0 + $0x4] sm:$0xf]
    %v91 = vld [vmem:[%s0 + $0x8] sm:$0xf]
    %v92 = vld [vmem:[%s0 + $0xc] sm:$0xf]
    %v93 = vld [vmem:[%s0 + $0x10] sm:$0xf]
    %v94 = vld [vmem:[%s0 + $0x14] sm:$0xf]
    %v95 = vld [vmem:[%s0 + $0x18] sm:$0xf]
    %v96 = vld [vmem:[%s0 + $0x1c] sm:$0xf]
    %v97 = vld [vmem:[#allocation2] sm:$0xff]
    %v98 = vld [vmem:[#allocation2 + $0x8] sm:$0xff]
    %v99 = vld [vmem:[#allocation2 + $0x10] sm:$0xff]
    %v100 = vld [vmem:[#allocation2 + $0x18] sm:$0xff]
    %v101 = vld [vmem:[#allocation2 + $0x20] sm:$0xff]
    %v102 = vld [vmem:[#allocation2 + $0x28] sm:$0xff]
    %v103 = vld [vmem:[#allocation2 + $0x30] sm:$0xff]
    %v104 = vld [vmem:[#allocation2 + $0x38] sm:$0xff]
    %v105 = vld [vmem:[#allocation2 + $0x40] sm:$0xff]
    %v106 = vld [vmem:[#allocation2 + $0x48] sm:$0xff]
    %v107 = vld [vmem:[#allocation2 + $0x50] sm:$0xff]
    %v108 = vld [vmem:[#allocation2 + $0x58] sm:$0xff]
    %v109 = vld [vmem:[#allocation2 + $0x60] sm:$0x77]
    %v110 = vld [vmem:[#allocation2 + $0x68] sm:$0x77]
    %v111 = vld [vmem:[%s2] sm:$0xf]
    %v113 = vlaneseq
    %v114 = vshrl.u32 %v113, 7
    %v115 = vsub.s32 0, %v114
    %v116 = vrot.slane %v111, %v115
    %v117 = vlaneseq
    %v118 = vshrl.u32 %v117, 7
    %v119 = vsub.s32 1, %v118
    %v120 = vrot.slane %v111, %v119
    %v121 = vlaneseq
    %v122 = vshrl.u32 %v121, 7
    %v123 = vsub.s32 2, %v122
    %v124 = vrot.slane %v111, %v123
    %v125 = vlaneseq
    %v126 = vshrl.u32 %v125, 7
    %v127 = vsub.s32 3, %v126
    %v128 = vrot.slane %v111, %v127
    %v141 = vunpack.c.l.b16 %v89
    %v142 = vunpack.c.l.b16 %v90
    %v143 = vunpack.c.l.b16 %v91
    %v144 = vunpack.c.l.b16 %v92
    %v145 = vunpack.c.l.b16 %v93
    %v146 = vunpack.c.l.b16 %v94
    %v147 = vunpack.c.l.b16 %v95
    %v148 = vunpack.c.l.b16 %v96
    %v149 = vpack.c.b16 %v142, %v141
    %v150 = vpack.c.b16 %v144, %v143
    %v151 = vpack.c.b16 %v146, %v145
    %v152 = vpack.c.b16 %v148, %v147
    %v167 = vunpack.c.l.b16 %v97
    %v168 = vunpack.c.h.b16 %v97
    %v169 = vunpack.c.l.b16 %v98
    %v170 = vunpack.c.h.b16 %v98
    %v171 = vunpack.c.l.b16 %v99
    %v172 = vunpack.c.h.b16 %v99
    %v173 = vunpack.c.l.b16 %v100
    %v174 = vunpack.c.h.b16 %v100
    %v175 = vunpack.c.l.b16 %v101
    %v176 = vunpack.c.h.b16 %v101
    %v177 = vunpack.c.l.b16 %v102
    %v178 = vunpack.c.h.b16 %v102
    %v179 = vunpack.c.l.b16 %v103
    %v180 = vunpack.c.h.b16 %v103
    %v181 = vunpack.c.l.b16 %v104
    %v182 = vunpack.c.h.b16 %v104
    %v183 = vunpack.c.l.b16 %v105
    %v184 = vunpack.c.h.b16 %v105
    %v185 = vunpack.c.l.b16 %v106
    %v186 = vunpack.c.h.b16 %v106
    %v187 = vunpack.c.l.b16 %v107
    %v188 = vunpack.c.h.b16 %v107
    %v189 = vunpack.c.l.b16 %v108
    %v190 = vunpack.c.h.b16 %v108
    %v191 = vunpack.c.l.b16 %v109
    %v192 = vunpack.c.h.b16 %v109
    %v193 = vunpack.c.l.b16 %v110
    %v194 = vunpack.c.h.b16 %v110
    %v195 = vpack.c.b16 %v171, %v167
    %v196 = vpack.c.b16 %v172, %v168
    %v197 = vpack.c.b16 %v173, %v169
    %v198 = vpack.c.b16 %v174, %v170
    %v199 = vpack.c.b16 %v179, %v175
    %v200 = vpack.c.b16 %v180, %v176
    %v201 = vpack.c.b16 %v181, %v177
    %v202 = vpack.c.b16 %v182, %v178
    %v203 = vpack.c.b16 %v187, %v183
    %v204 = vpack.c.b16 %v188, %v184
    %v205 = vpack.c.b16 %v189, %v185
    %v206 = vpack.c.b16 %v190, %v186
    %v207 = vpack.c.b16 %v191, %v191
    %v208 = vpack.c.b16 %v192, %v192
    %v209 = vpack.c.b16 %v193, %v193
    %v210 = vpack.c.b16 %v194, %v194
    %vm223 = vcmask 441344
    %v225 = vsel %vm223, %v149, 0
    %v228 = vsel %vm223, %v150, 0
    %v231 = vsel %vm223, %v151, 0
    %v234 = vsel %vm223, %v152, 0
    %vm236 = vcmask 1042432
    %v238 = vsel %vm236, %v207, 0
    %v241 = vsel %vm236, %v208, 0
    %v244 = vsel %vm236, %v209, 0
    %v247 = vsel %vm236, %v210, 0
    %249 = vmatprep.subr.bf16.mxu0 %v196
    %250 = vmatpush1.bf16.msra.mxu0 %v195
    %251 = vmatprep.subr.bf16.mxu0 %v200
    %252 = vmatpush1.bf16.msra.mxu0 %v199
    %253 = vmatprep.subr.bf16.mxu0 %v204
    %254 = vmatpush1.bf16.msra.mxu0 %v203
    %255 = vmatprep.subr.bf16.mxu0 %v241
    %256 = vmatpush1.bf16.msra.mxu0 %v238
    %257 = vmatprep.subr.bf16.mxu0 0
    %258 = vmatpush1.bf16.msra.mxu0 0
    %259 = vmatprep.subr.bf16.mxu0 0
    %260 = vmatpush1.bf16.msra.mxu0 0
    %261 = vmatprep.subr.bf16.mxu0 0
    %262 = vmatpush1.bf16.msra.mxu0 0
    %263 = vmatprep.subr.bf16.mxu0 0
    %264 = vmatpush1.bf16.msra.mxu0 0
    %265 = vmatprep.subr.bf16.mxu0 0
    %266 = vmatpush1.bf16.msra.mxu0 0
    %267 = vmatprep.subr.bf16.mxu0 0
    %268 = vmatpush1.bf16.msra.mxu0 0
    %269 = vmatprep.subr.bf16.mxu0 0
    %270 = vmatpush1.bf16.msra.mxu0 0
    %271 = vmatprep.subr.bf16.mxu0 0
    %272 = vmatpush1.bf16.msra.mxu0 0
    %273 = vmatprep.subr.bf16.mxu0 0
    %274 = vmatpush1.bf16.msra.mxu0 0
    %275 = vmatprep.subr.bf16.mxu0 0
    %276 = vmatpush1.bf16.msra.mxu0 0
    %277 = vmatprep.subr.bf16.mxu0 0
    %278 = vmatpush1.bf16.msra.mxu0 0
    %279 = vmatprep.subr.bf16.mxu0 0
    %280 = vmatpush1.bf16.msra.mxu0 0
    %281 = vmatprep.mubr.bf16.mxu0 0
    %282 = vmatmul.mubr.bf16.gmra.mrb[0].mxu0 %v225
    %v283 = vpop.f32.mrb[0].mxu0
    %v284 = vadd.f32 %v116, %v283
    %v285 = vpop.f32.mrb[0].mxu0
    %v286 = vadd.f32 %v120, %v285
    %v287 = vpop.f32.mrb[0].mxu0
    %v288 = vadd.f32 %v116, %v287
    %v289 = vpop.f32.mrb[0].mxu0
    %v290 = vadd.f32 %v120, %v289
    %291 = vmatprep.mubr.bf16.mxu0 0
    %292 = vmatmul.mubr.bf16.gmra.mrb[0].mxu0 %v228
    %v293 = vpop.f32.mrb[0].mxu0
    %v294 = vadd.f32 %v116, %v293
    %v295 = vpop.f32.mrb[0].mxu0
    %v296 = vadd.f32 %v120, %v295
    %v297 = vpop.f32.mrb[0].mxu0
    %v298 = vadd.f32 %v116, %v297
    %v299 = vpop.f32.mrb[0].mxu0
    %v300 = vadd.f32 %v120, %v299
    %301 = vmatprep.mubr.bf16.mxu0 0
    %302 = vmatmul.mubr.bf16.gmra.mrb[0].mxu0 %v231
    %v303 = vpop.f32.mrb[0].mxu0
    %v304 = vadd.f32 %v116, %v303
    %v305 = vpop.f32.mrb[0].mxu0
    %v306 = vadd.f32 %v120, %v305
    %v307 = vpop.f32.mrb[0].mxu0
    %v308 = vadd.f32 %v116, %v307
    %v309 = vpop.f32.mrb[0].mxu0
    %v310 = vadd.f32 %v120, %v309
    %311 = vmatprep.mubr.bf16.mxu0 0
    %312 = vmatmul.mubr.bf16.gmra.mrb[0].mxu0 %v234
    %v313 = vpop.f32.mrb[0].mxu0
    %v314 = vadd.f32 %v116, %v313
    %v315 = vpop.f32.mrb[0].mxu0
    %v316 = vadd.f32 %v120, %v315
    %v317 = vpop.f32.mrb[0].mxu0
    %v318 = vadd.f32 %v116, %v317
    %v319 = vpop.f32.mrb[0].mxu0
    %v320 = vadd.f32 %v120, %v319
    %321 = vdwg.mxu0
    %322 = vmatprep.subr.bf16.mxu0 %v198
    %323 = vmatpush1.bf16.msra.mxu0 %v197
    %324 = vmatprep.subr.bf16.mxu0 %v202
    %325 = vmatpush1.bf16.msra.mxu0 %v201
    %326 = vmatprep.subr.bf16.mxu0 %v206
    %327 = vmatpush1.bf16.msra.mxu0 %v205
    %328 = vmatprep.subr.bf16.mxu0 %v247
    %329 = vmatpush1.bf16.msra.mxu0 %v244
    %330 = vmatprep.subr.bf16.mxu0 0
    %331 = vmatpush1.bf16.msra.mxu0 0
    %332 = vmatprep.subr.bf16.mxu0 0
    %333 = vmatpush1.bf16.msra.mxu0 0
    %334 = vmatprep.subr.bf16.mxu0 0
    %335 = vmatpush1.bf16.msra.mxu0 0
    %336 = vmatprep.subr.bf16.mxu0 0
    %337 = vmatpush1.bf16.msra.mxu0 0
    %338 = vmatprep.subr.bf16.mxu0 0
    %339 = vmatpush1.bf16.msra.mxu0 0
    %340 = vmatprep.subr.bf16.mxu0 0
    %341 = vmatpush1.bf16.msra.mxu0 0
    %342 = vmatprep.subr.bf16.mxu0 0
    %343 = vmatpush1.bf16.msra.mxu0 0
    %344 = vmatprep.subr.bf16.mxu0 0
    %345 = vmatpush1.bf16.msra.mxu0 0
    %346 = vmatprep.subr.bf16.mxu0 0
    %347 = vmatpush1.bf16.msra.mxu0 0
    %348 = vmatprep.subr.bf16.mxu0 0
    %349 = vmatpush1.bf16.msra.mxu0 0
    %350 = vmatprep.subr.bf16.mxu0 0
    %351 = vmatpush1.bf16.msra.mxu0 0
    %352 = vmatprep.subr.bf16.mxu0 0
    %353 = vmatpush1.bf16.msra.mxu0 0
    %354 = vmatprep.mubr.bf16.mxu0 0
    %355 = vmatmul.mubr.bf16.gmra.mrb[0].mxu0 %v225
    %v356 = vpop.f32.mrb[0].mxu0
    %v357 = vadd.f32 %v124, %v356
    %v358 = vpop.f32.mrb[0].mxu0
    %v359 = vadd.f32 %v128, %v358
    %v360 = vpop.f32.mrb[0].mxu0
    %v361 = vadd.f32 %v124, %v360
    %v362 = vpop.f32.mrb[0].mxu0
    %v363 = vadd.f32 %v128, %v362
    %364 = vmatprep.mubr.bf16.mxu0 0
    %365 = vmatmul.mubr.bf16.gmra.mrb[0].mxu0 %v228
    %v366 = vpop.f32.mrb[0].mxu0
    %v367 = vadd.f32 %v124, %v366
    %v368 = vpop.f32.mrb[0].mxu0
    %v369 = vadd.f32 %v128, %v368
    %v370 = vpop.f32.mrb[0].mxu0
    %v371 = vadd.f32 %v124, %v370
    %v372 = vpop.f32.mrb[0].mxu0
    %v373 = vadd.f32 %v128, %v372
    %374 = vmatprep.mubr.bf16.mxu0 0
    %375 = vmatmul.mubr.bf16.gmra.mrb[0].mxu0 %v231
    %v376 = vpop.f32.mrb[0].mxu0
    %v377 = vadd.f32 %v124, %v376
    %v378 = vpop.f32.mrb[0].mxu0
    %v379 = vadd.f32 %v128, %v378
    %v380 = vpop.f32.mrb[0].mxu0
    %v381 = vadd.f32 %v124, %v380
    %v382 = vpop.f32.mrb[0].mxu0
    %v383 = vadd.f32 %v128, %v382
    %384 = vmatprep.mubr.bf16.mxu0 0
    %385 = vmatmul.mubr.bf16.gmra.mrb[0].mxu0 %v234
    %v386 = vpop.f32.mrb[0].mxu0
    %v387 = vadd.f32 %v124, %v386
    %v388 = vpop.f32.mrb[0].mxu0
    %v389 = vadd.f32 %v128, %v388
    %v390 = vpop.f32.mrb[0].mxu0
    %v391 = vadd.f32 %v124, %v390
    %v392 = vpop.f32.mrb[0].mxu0
    %v393 = vadd.f32 %v128, %v392
    %394 = vdwg.mxu0
    %v395 = vmax.f32 %v284, 0.0
    %v396 = vmax.f32 %v286, 0.0
    %v397 = vmax.f32 %v357, 0.0
    %v398 = vmax.f32 %v359, 0.0
    %v399 = vmax.f32 %v288, 0.0
    %v400 = vmax.f32 %v290, 0.0
    %v401 = vmax.f32 %v361, 0.0
    %v402 = vmax.f32 %v363, 0.0
    %v403 = vmax.f32 %v294, 0.0
    %v404 = vmax.f32 %v296, 0.0
    %v405 = vmax.f32 %v367, 0.0
    %v406 = vmax.f32 %v369, 0.0
    %v407 = vmax.f32 %v298, 0.0
    %v408 = vmax.f32 %v300, 0.0
    %v409 = vmax.f32 %v371, 0.0
    %v410 = vmax.f32 %v373, 0.0
    %v411 = vmax.f32 %v304, 0.0
    %v412 = vmax.f32 %v306, 0.0
    %v413 = vmax.f32 %v377, 0.0
    %v414 = vmax.f32 %v379, 0.0
    %v415 = vmax.f32 %v308, 0.0
    %v416 = vmax.f32 %v310, 0.0
    %v417 = vmax.f32 %v381, 0.0
    %v418 = vmax.f32 %v383, 0.0
    %v419 = vmax.f32 %v314, 0.0
    %v420 = vmax.f32 %v316, 0.0
    %v421 = vmax.f32 %v387, 0.0
    %v422 = vmax.f32 %v389, 0.0
    %v423 = vmax.f32 %v318, 0.0
    %v424 = vmax.f32 %v320, 0.0
    %v425 = vmax.f32 %v391, 0.0
    %v426 = vmax.f32 %v393, 0.0
    %v427 = vpack.c.bf16 %v399, %v395
    %v428 = vpack.c.bf16 %v400, %v396
    %v429 = vpack.c.bf16 %v401, %v397
    %v430 = vpack.c.bf16 %v402, %v398
    %v431 = vpack.c.bf16 %v407, %v403
    %v432 = vpack.c.bf16 %v408, %v404
    %v433 = vpack.c.bf16 %v409, %v405
    %v434 = vpack.c.bf16 %v410, %v406
    %v435 = vpack.c.bf16 %v415, %v411
    %v436 = vpack.c.bf16 %v416, %v412
    %v437 = vpack.c.bf16 %v417, %v413
    %v438 = vpack.c.bf16 %v418, %v414
    %v439 = vpack.c.bf16 %v423, %v419
    %v440 = vpack.c.bf16 %v424, %v420
    %v441 = vpack.c.bf16 %v425, %v421
    %v442 = vpack.c.bf16 %v426, %v422
    %v443 = vld [vmem:[#allocation5] sm:$0xff]
    %v444 = vld [vmem:[#allocation5 + $0x8] sm:$0xff]
    %v445 = vld [vmem:[#allocation5 + $0x10] sm:$0xff]
    %v446 = vld [vmem:[#allocation5 + $0x18] sm:$0xff]
    %v447 = vld [vmem:[#allocation5 + $0x20] sm:$0xff]
    %v448 = vld [vmem:[#allocation5 + $0x28] sm:$0xff]
    %v449 = vld [vmem:[#allocation5 + $0x30] sm:$0xff]
    %v450 = vld [vmem:[#allocation5 + $0x38] sm:$0xff]
    %v451 = vld [vmem:[#allocation5 + $0x40] sm:$0xff]
    %v452 = vld [vmem:[#allocation5 + $0x48] sm:$0xff]
    %v453 = vld [vmem:[#allocation5 + $0x50] sm:$0xff]
    %v454 = vld [vmem:[#allocation5 + $0x58] sm:$0xff]
    %v455 = vld [vmem:[#allocation5 + $0x60] sm:$0xff]
    %v456 = vld [vmem:[#allocation5 + $0x68] sm:$0xff]
    %v457 = vld [vmem:[#allocation5 + $0x70] sm:$0xff]
    %v458 = vld [vmem:[#allocation5 + $0x78] sm:$0xff]
    %v459 = vld [vmem:[#allocation5 + $0x80] sm:$0xff]
    %v460 = vld [vmem:[#allocation5 + $0x88] sm:$0xff]
    %v461 = vld [vmem:[#allocation5 + $0x90] sm:$0xff]
    %v462 = vld [vmem:[#allocation5 + $0x98] sm:$0xff]
    %v463 = vld [vmem:[#allocation5 + $0xa0] sm:$0xff]
    %v464 = vld [vmem:[#allocation5 + $0xa8] sm:$0xff]
    %v465 = vld [vmem:[#allocation5 + $0xb0] sm:$0xff]
    %v466 = vld [vmem:[#allocation5 + $0xb8] sm:$0xff]
    %v467 = vld [vmem:[#allocation5 + $0xc0] sm:$0xff]
    %v468 = vld [vmem:[#allocation5 + $0xc8] sm:$0xff]
    %v469 = vld [vmem:[#allocation5 + $0xd0] sm:$0xff]
    %v470 = vld [vmem:[#allocation5 + $0xd8] sm:$0xff]
    %v471 = vld [vmem:[#allocation5 + $0xe0] sm:$0xff]
    %v472 = vld [vmem:[#allocation5 + $0xe8] sm:$0xff]
    %v473 = vld [vmem:[#allocation5 + $0xf0] sm:$0xff]
    %v474 = vld [vmem:[#allocation5 + $0xf8] sm:$0xff]
    %v475 = vld [vmem:[#allocation5 + $0x100] sm:$0xff]
    %v476 = vld [vmem:[#allocation5 + $0x108] sm:$0xff]
    %v477 = vld [vmem:[#allocation5 + $0x110] sm:$0xff]
    %v478 = vld [vmem:[#allocation5 + $0x118] sm:$0xff]
    %v479 = vld [vmem:[#allocation5 + $0x120] sm:$0xff]
    %v480 = vld [vmem:[#allocation5 + $0x128] sm:$0xff]
    %v481 = vld [vmem:[#allocation5 + $0x130] sm:$0xff]
    %v482 = vld [vmem:[#allocation5 + $0x138] sm:$0xff]
    %v483 = vld [vmem:[#allocation5 + $0x140] sm:$0xff]
    %v484 = vld [vmem:[#allocation5 + $0x148] sm:$0xff]
    %v485 = vld [vmem:[#allocation5 + $0x150] sm:$0xff]
    %v486 = vld [vmem:[#allocation5 + $0x158] sm:$0xff]
    %v487 = vld [vmem:[#allocation5 + $0x160] sm:$0xff]
    %v488 = vld [vmem:[#allocation5 + $0x168] sm:$0xff]
    %v489 = vld [vmem:[#allocation5 + $0x170] sm:$0xff]
    %v490 = vld [vmem:[#allocation5 + $0x178] sm:$0xff]
    %v491 = vld [vmem:[#allocation5 + $0x180] sm:$0xff]
    %v492 = vld [vmem:[#allocation5 + $0x188] sm:$0xff]
    %v493 = vld [vmem:[#allocation5 + $0x190] sm:$0xff]
    %v494 = vld [vmem:[#allocation5 + $0x198] sm:$0xff]
    %v495 = vld [vmem:[#allocation5 + $0x1a0] sm:$0xff]
    %v496 = vld [vmem:[#allocation5 + $0x1a8] sm:$0xff]
    %v497 = vld [vmem:[#allocation5 + $0x1b0] sm:$0xff]
    %v498 = vld [vmem:[#allocation5 + $0x1b8] sm:$0xff]
    %v499 = vld [vmem:[#allocation5 + $0x1c0] sm:$0xff]
    %v500 = vld [vmem:[#allocation5 + $0x1c8] sm:$0xff]
    %v501 = vld [vmem:[#allocation5 + $0x1d0] sm:$0xff]
    %v502 = vld [vmem:[#allocation5 + $0x1d8] sm:$0xff]
    %v503 = vld [vmem:[#allocation5 + $0x1e0] sm:$0xff]
    %v504 = vld [vmem:[#allocation5 + $0x1e8] sm:$0xff]
    %v505 = vld [vmem:[#allocation5 + $0x1f0] sm:$0xff]
    %v506 = vld [vmem:[#allocation5 + $0x1f8] sm:$0xff]
    %v507 = vld [vmem:[#allocation5 + $0x200] sm:$0xff]
    %v508 = vld [vmem:[#allocation5 + $0x208] sm:$0xff]
    %v509 = vld [vmem:[#allocation5 + $0x210] sm:$0xff]
    %v510 = vld [vmem:[#allocation5 + $0x218] sm:$0xff]
    %v511 = vld [vmem:[#allocation5 + $0x220] sm:$0xff]
    %v512 = vld [vmem:[#allocation5 + $0x228] sm:$0xff]
    %v513 = vld [vmem:[#allocation5 + $0x230] sm:$0xff]
    %v514 = vld [vmem:[#allocation5 + $0x238] sm:$0xff]
    %v515 = vld [vmem:[#allocation5 + $0x240] sm:$0xff]
    %v516 = vld [vmem:[#allocation5 + $0x248] sm:$0xff]
    %v517 = vld [vmem:[#allocation5 + $0x250] sm:$0xff]
    %v518 = vld [vmem:[#allocation5 + $0x258] sm:$0xff]
    %v519 = vld [vmem:[#allocation5 + $0x260] sm:$0xff]
    %v520 = vld [vmem:[#allocation5 + $0x268] sm:$0xff]
    %v521 = vld [vmem:[#allocation5 + $0x270] sm:$0xff]
    %v522 = vld [vmem:[#allocation5 + $0x278] sm:$0xff]
    %v523 = vld [vmem:[#allocation5 + $0x280] sm:$0xff]
    %v524 = vld [vmem:[#allocation5 + $0x288] sm:$0xff]
    %v525 = vld [vmem:[#allocation5 + $0x290] sm:$0xff]
    %v526 = vld [vmem:[#allocation5 + $0x298] sm:$0xff]
    %v527 = vld [vmem:[#allocation5 + $0x2a0] sm:$0xff]
    %v528 = vld [vmem:[#allocation5 + $0x2a8] sm:$0xff]
    %v529 = vld [vmem:[#allocation5 + $0x2b0] sm:$0xff]
    %v530 = vld [vmem:[#allocation5 + $0x2b8] sm:$0xff]
    %v531 = vld [vmem:[#allocation5 + $0x2c0] sm:$0xff]
    %v532 = vld [vmem:[#allocation5 + $0x2c8] sm:$0xff]
    %v533 = vld [vmem:[#allocation5 + $0x2d0] sm:$0xff]
    %v534 = vld [vmem:[#allocation5 + $0x2d8] sm:$0xff]
    %v535 = vld [vmem:[#allocation5 + $0x2e0] sm:$0xff]
    %v536 = vld [vmem:[#allocation5 + $0x2e8] sm:$0xff]
    %v537 = vld [vmem:[#allocation5 + $0x2f0] sm:$0xff]
    %v538 = vld [vmem:[#allocation5 + $0x2f8] sm:$0xff]
    %v539 = vld [vmem:[#allocation5 + $0x300] sm:$0xff]
    %v540 = vld [vmem:[#allocation5 + $0x308] sm:$0xff]
    %v541 = vld [vmem:[#allocation5 + $0x310] sm:$0xff]
    %v542 = vld [vmem:[#allocation5 + $0x318] sm:$0xff]
    %v543 = vld [vmem:[#allocation5 + $0x320] sm:$0xff]
    %v544 = vld [vmem:[#allocation5 + $0x328] sm:$0xff]
    %v545 = vld [vmem:[#allocation5 + $0x330] sm:$0xff]
    %v546 = vld [vmem:[#allocation5 + $0x338] sm:$0xff]
    %v547 = vld [vmem:[#allocation5 + $0x340] sm:$0xff]
    %v548 = vld [vmem:[#allocation5 + $0x348] sm:$0xff]
    %v549 = vld [vmem:[#allocation5 + $0x350] sm:$0xff]
    %v550 = vld [vmem:[#allocation5 + $0x358] sm:$0xff]
    %v551 = vld [vmem:[#allocation5 + $0x360] sm:$0xff]
    %v552 = vld [vmem:[#allocation5 + $0x368] sm:$0xff]
    %v553 = vld [vmem:[#allocation5 + $0x370] sm:$0xff]
    %v554 = vld [vmem:[#allocation5 + $0x378] sm:$0xff]
    %v555 = vld [vmem:[#allocation5 + $0x380] sm:$0xff]
    %v556 = vld [vmem:[#allocation5 + $0x388] sm:$0xff]
    %v557 = vld [vmem:[#allocation5 + $0x390] sm:$0xff]
    %v558 = vld [vmem:[#allocation5 + $0x398] sm:$0xff]
    %v559 = vld [vmem:[#allocation5 + $0x3a0] sm:$0xff]
    %v560 = vld [vmem:[#allocation5 + $0x3a8] sm:$0xff]
    %v561 = vld [vmem:[#allocation5 + $0x3b0] sm:$0xff]
    %v562 = vld [vmem:[#allocation5 + $0x3b8] sm:$0xff]
    %v563 = vld [vmem:[#allocation5 + $0x3c0] sm:$0xff]
    %v564 = vld [vmem:[#allocation5 + $0x3c8] sm:$0xff]
    %v565 = vld [vmem:[#allocation5 + $0x3d0] sm:$0xff]
    %v566 = vld [vmem:[#allocation5 + $0x3d8] sm:$0xff]
    %v567 = vld [vmem:[#allocation5 + $0x3e0] sm:$0xff]
    %v568 = vld [vmem:[#allocation5 + $0x3e8] sm:$0xff]
    %v569 = vld [vmem:[#allocation5 + $0x3f0] sm:$0xff]
    %v570 = vld [vmem:[#allocation5 + $0x3f8] sm:$0xff]
    %v571 = vld [vmem:[%s4] sm:$0xf]
    %v573 = vlaneseq
    %v574 = vshrl.u32 %v573, 7
    %v575 = vsub.s32 0, %v574
    %v576 = vrot.slane %v571, %v575
    %v577 = vlaneseq
    %v578 = vshrl.u32 %v577, 7
    %v579 = vsub.s32 1, %v578
    %v580 = vrot.slane %v571, %v579
    %v581 = vlaneseq
    %v582 = vshrl.u32 %v581, 7
    %v583 = vsub.s32 2, %v582
    %v584 = vrot.slane %v571, %v583
    %v585 = vlaneseq
    %v586 = vshrl.u32 %v585, 7
    %v587 = vsub.s32 3, %v586
    %v588 = vrot.slane %v571, %v587
    %v721 = vunpack.c.l.b16 %v443
    %v722 = vunpack.c.h.b16 %v443
    %v723 = vunpack.c.l.b16 %v444
    %v724 = vunpack.c.h.b16 %v444
    %v725 = vunpack.c.l.b16 %v445
    %v726 = vunpack.c.h.b16 %v445
    %v727 = vunpack.c.l.b16 %v446
    %v728 = vunpack.c.h.b16 %v446
    %v729 = vunpack.c.l.b16 %v447
    %v730 = vunpack.c.h.b16 %v447
    %v731 = vunpack.c.l.b16 %v448
    %v732 = vunpack.c.h.b16 %v448
    %v733 = vunpack.c.l.b16 %v449
    %v734 = vunpack.c.h.b16 %v449
    %v735 = vunpack.c.l.b16 %v450
    %v736 = vunpack.c.h.b16 %v450
    %v737 = vunpack.c.l.b16 %v451
    %v738 = vunpack.c.h.b16 %v451
    %v739 = vunpack.c.l.b16 %v452
    %v740 = vunpack.c.h.b16 %v452
    %v741 = vunpack.c.l.b16 %v453
    %v742 = vunpack.c.h.b16 %v453
    %v743 = vunpack.c.l.b16 %v454
    %v744 = vunpack.c.h.b16 %v454
    %v745 = vunpack.c.l.b16 %v455
    %v746 = vunpack.c.h.b16 %v455
    %v747 = vunpack.c.l.b16 %v456
    %v748 = vunpack.c.h.b16 %v456
    %v749 = vunpack.c.l.b16 %v457
    %v750 = vunpack.c.h.b16 %v457
    %v751 = vunpack.c.l.b16 %v458
    %v752 = vunpack.c.h.b16 %v458
    %v753 = vunpack.c.l.b16 %v459
    %v754 = vunpack.c.h.b16 %v459
    %v755 = vunpack.c.l.b16 %v460
    %v756 = vunpack.c.h.b16 %v460
    %v757 = vunpack.c.l.b16 %v461
    %v758 = vunpack.c.h.b16 %v461
    %v759 = vunpack.c.l.b16 %v462
    %v760 = vunpack.c.h.b16 %v462
    %v761 = vunpack.c.l.b16 %v463
    %v762 = vunpack.c.h.b16 %v463
    %v763 = vunpack.c.l.b16 %v464
    %v764 = vunpack.c.h.b16 %v464
    %v765 = vunpack.c.l.b16 %v465
    %v766 = vunpack.c.h.b16 %v465
    %v767 = vunpack.c.l.b16 %v466
    %v768 = vunpack.c.h.b16 %v466
    %v769 = vunpack.c.l.b16 %v467
    %v770 = vunpack.c.h.b16 %v467
    %v771 = vunpack.c.l.b16 %v468
    %v772 = vunpack.c.h.b16 %v468
    %v773 = vunpack.c.l.b16 %v469
    %v774 = vunpack.c.h.b16 %v469
    %v775 = vunpack.c.l.b16 %v470
    %v776 = vunpack.c.h.b16 %v470
    %v777 = vunpack.c.l.b16 %v471
    %v778 = vunpack.c.h.b16 %v471
    %v779 = vunpack.c.l.b16 %v472
    %v780 = vunpack.c.h.b16 %v472
    %v781 = vunpack.c.l.b16 %v473
    %v782 = vunpack.c.h.b16 %v473
    %v783 = vunpack.c.l.b16 %v474
    %v784 = vunpack.c.h.b16 %v474
    %v785 = vunpack.c.l.b16 %v475
    %v786 = vunpack.c.h.b16 %v475
    %v787 = vunpack.c.l.b16 %v476
    %v788 = vunpack.c.h.b16 %v476
    %v789 = vunpack.c.l.b16 %v477
    %v790 = vunpack.c.h.b16 %v477
    %v791 = vunpack.c.l.b16 %v478
    %v792 = vunpack.c.h.b16 %v478
    %v793 = vunpack.c.l.b16 %v479
    %v794 = vunpack.c.h.b16 %v479
    %v795 = vunpack.c.l.b16 %v480
    %v796 = vunpack.c.h.b16 %v480
    %v797 = vunpack.c.l.b16 %v481
    %v798 = vunpack.c.h.b16 %v481
    %v799 = vunpack.c.l.b16 %v482
    %v800 = vunpack.c.h.b16 %v482
    %v801 = vunpack.c.l.b16 %v483
    %v802 = vunpack.c.h.b16 %v483
    %v803 = vunpack.c.l.b16 %v484
    %v804 = vunpack.c.h.b16 %v484
    %v805 = vunpack.c.l.b16 %v485
    %v806 = vunpack.c.h.b16 %v485
    %v807 = vunpack.c.l.b16 %v486
    %v808 = vunpack.c.h.b16 %v486
    %v809 = vunpack.c.l.b16 %v487
    %v810 = vunpack.c.h.b16 %v487
    %v811 = vunpack.c.l.b16 %v488
    %v812 = vunpack.c.h.b16 %v488
    %v813 = vunpack.c.l.b16 %v489
    %v814 = vunpack.c.h.b16 %v489
    %v815 = vunpack.c.l.b16 %v490
    %v816 = vunpack.c.h.b16 %v490
    %v817 = vunpack.c.l.b16 %v491
    %v818 = vunpack.c.h.b16 %v491
    %v819 = vunpack.c.l.b16 %v492
    %v820 = vunpack.c.h.b16 %v492
    %v821 = vunpack.c.l.b16 %v493
    %v822 = vunpack.c.h.b16 %v493
    %v823 = vunpack.c.l.b16 %v494
    %v824 = vunpack.c.h.b16 %v494
    %v825 = vunpack.c.l.b16 %v495
    %v826 = vunpack.c.h.b16 %v495
    %v827 = vunpack.c.l.b16 %v496
    %v828 = vunpack.c.h.b16 %v496
    %v829 = vunpack.c.l.b16 %v497
    %v830 = vunpack.c.h.b16 %v497
    %v831 = vunpack.c.l.b16 %v498
    %v832 = vunpack.c.h.b16 %v498
    %v833 = vunpack.c.l.b16 %v499
    %v834 = vunpack.c.h.b16 %v499
    %v835 = vunpack.c.l.b16 %v500
    %v836 = vunpack.c.h.b16 %v500
    %v837 = vunpack.c.l.b16 %v501
    %v838 = vunpack.c.h.b16 %v501
    %v839 = vunpack.c.l.b16 %v502
    %v840 = vunpack.c.h.b16 %v502
    %v841 = vunpack.c.l.b16 %v503
    %v842 = vunpack.c.h.b16 %v503
    %v843 = vunpack.c.l.b16 %v504
    %v844 = vunpack.c.h.b16 %v504
    %v845 = vunpack.c.l.b16 %v505
    %v846 = vunpack.c.h.b16 %v505
    %v847 = vunpack.c.l.b16 %v506
    %v848 = vunpack.c.h.b16 %v506
    %v849 = vunpack.c.l.b16 %v507
    %v850 = vunpack.c.h.b16 %v507
    %v851 = vunpack.c.l.b16 %v508
    %v852 = vunpack.c.h.b16 %v508
    %v853 = vunpack.c.l.b16 %v509
    %v854 = vunpack.c.h.b16 %v509
    %v855 = vunpack.c.l.b16 %v510
    %v856 = vunpack.c.h.b16 %v510
    %v857 = vunpack.c.l.b16 %v511
    %v858 = vunpack.c.h.b16 %v511
    %v859 = vunpack.c.l.b16 %v512
    %v860 = vunpack.c.h.b16 %v512
    %v861 = vunpack.c.l.b16 %v513
    %v862 = vunpack.c.h.b16 %v513
    %v863 = vunpack.c.l.b16 %v514
    %v864 = vunpack.c.h.b16 %v514
    %v865 = vunpack.c.l.b16 %v515
    %v866 = vunpack.c.h.b16 %v515
    %v867 = vunpack.c.l.b16 %v516
    %v868 = vunpack.c.h.b16 %v516
    %v869 = vunpack.c.l.b16 %v517
    %v870 = vunpack.c.h.b16 %v517
    %v871 = vunpack.c.l.b16 %v518
    %v872 = vunpack.c.h.b16 %v518
    %v873 = vunpack.c.l.b16 %v519
    %v874 = vunpack.c.h.b16 %v519
    %v875 = vunpack.c.l.b16 %v520
    %v876 = vunpack.c.h.b16 %v520
    %v877 = vunpack.c.l.b16 %v521
    %v878 = vunpack.c.h.b16 %v521
    %v879 = vunpack.c.l.b16 %v522
    %v880 = vunpack.c.h.b16 %v522
    %v881 = vunpack.c.l.b16 %v523
    %v882 = vunpack.c.h.b16 %v523
    %v883 = vunpack.c.l.b16 %v524
    %v884 = vunpack.c.h.b16 %v524
    %v885 = vunpack.c.l.b16 %v525
    %v886 = vunpack.c.h.b16 %v525
    %v887 = vunpack.c.l.b16 %v526
    %v888 = vunpack.c.h.b16 %v526
    %v889 = vunpack.c.l.b16 %v527
    %v890 = vunpack.c.h.b16 %v527
    %v891 = vunpack.c.l.b16 %v528
    %v892 = vunpack.c.h.b16 %v528
    %v893 = vunpack.c.l.b16 %v529
    %v894 = vunpack.c.h.b16 %v529
    %v895 = vunpack.c.l.b16 %v530
    %v896 = vunpack.c.h.b16 %v530
    %v897 = vunpack.c.l.b16 %v531
    %v898 = vunpack.c.h.b16 %v531
    %v899 = vunpack.c.l.b16 %v532
    %v900 = vunpack.c.h.b16 %v532
    %v901 = vunpack.c.l.b16 %v533
    %v902 = vunpack.c.h.b16 %v533
    %v903 = vunpack.c.l.b16 %v534
    %v904 = vunpack.c.h.b16 %v534
    %v905 = vunpack.c.l.b16 %v535
    %v906 = vunpack.c.h.b16 %v535
    %v907 = vunpack.c.l.b16 %v536
    %v908 = vunpack.c.h.b16 %v536
    %v909 = vunpack.c.l.b16 %v537
    %v910 = vunpack.c.h.b16 %v537
    %v911 = vunpack.c.l.b16 %v538
    %v912 = vunpack.c.h.b16 %v538
    %v913 = vunpack.c.l.b16 %v539
    %v914 = vunpack.c.h.b16 %v539
    %v915 = vunpack.c.l.b16 %v540
    %v916 = vunpack.c.h.b16 %v540
    %v917 = vunpack.c.l.b16 %v541
    %v918 = vunpack.c.h.b16 %v541
    %v919 = vunpack.c.l.b16 %v542
    %v920 = vunpack.c.h.b16 %v542
    %v921 = vunpack.c.l.b16 %v543
    %v922 = vunpack.c.h.b16 %v543
    %v923 = vunpack.c.l.b16 %v544
    %v924 = vunpack.c.h.b16 %v544
    %v925 = vunpack.c.l.b16 %v545
    %v926 = vunpack.c.h.b16 %v545
    %v927 = vunpack.c.l.b16 %v546
    %v928 = vunpack.c.h.b16 %v546
    %v929 = vunpack.c.l.b16 %v547
    %v930 = vunpack.c.h.b16 %v547
    %v931 = vunpack.c.l.b16 %v548
    %v932 = vunpack.c.h.b16 %v548
    %v933 = vunpack.c.l.b16 %v549
    %v934 = vunpack.c.h.b16 %v549
    %v935 = vunpack.c.l.b16 %v550
    %v936 = vunpack.c.h.b16 %v550
    %v937 = vunpack.c.l.b16 %v551
    %v938 = vunpack.c.h.b16 %v551
    %v939 = vunpack.c.l.b16 %v552
    %v940 = vunpack.c.h.b16 %v552
    %v941 = vunpack.c.l.b16 %v553
    %v942 = vunpack.c.h.b16 %v553
    %v943 = vunpack.c.l.b16 %v554
    %v944 = vunpack.c.h.b16 %v554
    %v945 = vunpack.c.l.b16 %v555
    %v946 = vunpack.c.h.b16 %v555
    %v947 = vunpack.c.l.b16 %v556
    %v948 = vunpack.c.h.b16 %v556
    %v949 = vunpack.c.l.b16 %v557
    %v950 = vunpack.c.h.b16 %v557
    %v951 = vunpack.c.l.b16 %v558
    %v952 = vunpack.c.h.b16 %v558
    %v953 = vunpack.c.l.b16 %v559
    %v954 = vunpack.c.h.b16 %v559
    %v955 = vunpack.c.l.b16 %v560
    %v956 = vunpack.c.h.b16 %v560
    %v957 = vunpack.c.l.b16 %v561
    %v958 = vunpack.c.h.b16 %v561
    %v959 = vunpack.c.l.b16 %v562
    %v960 = vunpack.c.h.b16 %v562
    %v961 = vunpack.c.l.b16 %v563
    %v962 = vunpack.c.h.b16 %v563
    %v963 = vunpack.c.l.b16 %v564
    %v964 = vunpack.c.h.b16 %v564
    %v965 = vunpack.c.l.b16 %v565
    %v966 = vunpack.c.h.b16 %v565
    %v967 = vunpack.c.l.b16 %v566
    %v968 = vunpack.c.h.b16 %v566
    %v969 = vunpack.c.l.b16 %v567
    %v970 = vunpack.c.h.b16 %v567
    %v971 = vunpack.c.l.b16 %v568
    %v972 = vunpack.c.h.b16 %v568
    %v973 = vunpack.c.l.b16 %v569
    %v974 = vunpack.c.h.b16 %v569
    %v975 = vunpack.c.l.b16 %v570
    %v976 = vunpack.c.h.b16 %v570
    %v977 = vpack.c.b16 %v725, %v721
    %v978 = vpack.c.b16 %v726, %v722
    %v979 = vpack.c.b16 %v727, %v723
    %v980 = vpack.c.b16 %v728, %v724
    %v981 = vpack.c.b16 %v733, %v729
    %v982 = vpack.c.b16 %v734, %v730
    %v983 = vpack.c.b16 %v735, %v731
    %v984 = vpack.c.b16 %v736, %v732
    %v985 = vpack.c.b16 %v741, %v737
    %v986 = vpack.c.b16 %v742, %v738
    %v987 = vpack.c.b16 %v743, %v739
    %v988 = vpack.c.b16 %v744, %v740
    %v989 = vpack.c.b16 %v749, %v745
    %v990 = vpack.c.b16 %v750, %v746
    %v991 = vpack.c.b16 %v751, %v747
    %v992 = vpack.c.b16 %v752, %v748
    %v993 = vpack.c.b16 %v757, %v753
    %v994 = vpack.c.b16 %v758, %v754
    %v995 = vpack.c.b16 %v759, %v755
    %v996 = vpack.c.b16 %v760, %v756
    %v997 = vpack.c.b16 %v765, %v761
    %v998 = vpack.c.b16 %v766, %v762
    %v999 = vpack.c.b16 %v767, %v763
    %v1000 = vpack.c.b16 %v768, %v764
    %v1001 = vpack.c.b16 %v773, %v769
    %v1002 = vpack.c.b16 %v774, %v770
    %v1003 = vpack.c.b16 %v775, %v771
    %v1004 = vpack.c.b16 %v776, %v772
    %v1005 = vpack.c.b16 %v781, %v777
    %v1006 = vpack.c.b16 %v782, %v778
    %v1007 = vpack.c.b16 %v783, %v779
    %v1008 = vpack.c.b16 %v784, %v780
    %v1009 = vpack.c.b16 %v789, %v785
    %v1010 = vpack.c.b16 %v790, %v786
    %v1011 = vpack.c.b16 %v791, %v787
    %v1012 = vpack.c.b16 %v792, %v788
    %v1013 = vpack.c.b16 %v797, %v793
    %v1014 = vpack.c.b16 %v798, %v794
    %v1015 = vpack.c.b16 %v799, %v795
    %v1016 = vpack.c.b16 %v800, %v796
    %v1017 = vpack.c.b16 %v805, %v801
    %v1018 = vpack.c.b16 %v806, %v802
    %v1019 = vpack.c.b16 %v807, %v803
    %v1020 = vpack.c.b16 %v808, %v804
    %v1021 = vpack.c.b16 %v813, %v809
    %v1022 = vpack.c.b16 %v814, %v810
    %v1023 = vpack.c.b16 %v815, %v811
    %v1024 = vpack.c.b16 %v816, %v812
    %v1025 = vpack.c.b16 %v821, %v817
    %v1026 = vpack.c.b16 %v822, %v818
    %v1027 = vpack.c.b16 %v823, %v819
    %v1028 = vpack.c.b16 %v824, %v820
    %v1029 = vpack.c.b16 %v829, %v825
    %v1030 = vpack.c.b16 %v830, %v826
    %v1031 = vpack.c.b16 %v831, %v827
    %v1032 = vpack.c.b16 %v832, %v828
    %v1033 = vpack.c.b16 %v837, %v833
    %v1034 = vpack.c.b16 %v838, %v834
    %v1035 = vpack.c.b16 %v839, %v835
    %v1036 = vpack.c.b16 %v840, %v836
    %v1037 = vpack.c.b16 %v845, %v841
    %v1038 = vpack.c.b16 %v846, %v842
    %v1039 = vpack.c.b16 %v847, %v843
    %v1040 = vpack.c.b16 %v848, %v844
    %v1041 = vpack.c.b16 %v853, %v849
    %v1042 = vpack.c.b16 %v854, %v850
    %v1043 = vpack.c.b16 %v855, %v851
    %v1044 = vpack.c.b16 %v856, %v852
    %v1045 = vpack.c.b16 %v861, %v857
    %v1046 = vpack.c.b16 %v862, %v858
    %v1047 = vpack.c.b16 %v863, %v859
    %v1048 = vpack.c.b16 %v864, %v860
    %v1049 = vpack.c.b16 %v869, %v865
    %v1050 = vpack.c.b16 %v870, %v866
    %v1051 = vpack.c.b16 %v871, %v867
    %v1052 = vpack.c.b16 %v872, %v868
    %v1053 = vpack.c.b16 %v877, %v873
    %v1054 = vpack.c.b16 %v878, %v874
    %v1055 = vpack.c.b16 %v879, %v875
    %v1056 = vpack.c.b16 %v880, %v876
    %v1057 = vpack.c.b16 %v885, %v881
    %v1058 = vpack.c.b16 %v886, %v882
    %v1059 = vpack.c.b16 %v887, %v883
    %v1060 = vpack.c.b16 %v888, %v884
    %v1061 = vpack.c.b16 %v893, %v889
    %v1062 = vpack.c.b16 %v894, %v890
    %v1063 = vpack.c.b16 %v895, %v891
    %v1064 = vpack.c.b16 %v896, %v892
    %v1065 = vpack.c.b16 %v901, %v897
    %v1066 = vpack.c.b16 %v902, %v898
    %v1067 = vpack.c.b16 %v903, %v899
    %v1068 = vpack.c.b16 %v904, %v900
    %v1069 = vpack.c.b16 %v909, %v905
    %v1070 = vpack.c.b16 %v910, %v906
    %v1071 = vpack.c.b16 %v911, %v907
    %v1072 = vpack.c.b16 %v912, %v908
    %v1073 = vpack.c.b16 %v917, %v913
    %v1074 = vpack.c.b16 %v918, %v914
    %v1075 = vpack.c.b16 %v919, %v915
    %v1076 = vpack.c.b16 %v920, %v916
    %v1077 = vpack.c.b16 %v925, %v921
    %v1078 = vpack.c.b16 %v926, %v922
    %v1079 = vpack.c.b16 %v927, %v923
    %v1080 = vpack.c.b16 %v928, %v924
    %v1081 = vpack.c.b16 %v933, %v929
    %v1082 = vpack.c.b16 %v934, %v930
    %v1083 = vpack.c.b16 %v935, %v931
    %v1084 = vpack.c.b16 %v936, %v932
    %v1085 = vpack.c.b16 %v941, %v937
    %v1086 = vpack.c.b16 %v942, %v938
    %v1087 = vpack.c.b16 %v943, %v939
    %v1088 = vpack.c.b16 %v944, %v940
    %v1089 = vpack.c.b16 %v949, %v945
    %v1090 = vpack.c.b16 %v950, %v946
    %v1091 = vpack.c.b16 %v951, %v947
    %v1092 = vpack.c.b16 %v952, %v948
    %v1093 = vpack.c.b16 %v957, %v953
    %v1094 = vpack.c.b16 %v958, %v954
    %v1095 = vpack.c.b16 %v959, %v955
    %v1096 = vpack.c.b16 %v960, %v956
    %v1097 = vpack.c.b16 %v965, %v961
    %v1098 = vpack.c.b16 %v966, %v962
    %v1099 = vpack.c.b16 %v967, %v963
    %v1100 = vpack.c.b16 %v968, %v964
    %v1101 = vpack.c.b16 %v973, %v969
    %v1102 = vpack.c.b16 %v974, %v970
    %v1103 = vpack.c.b16 %v975, %v971
    %v1104 = vpack.c.b16 %v976, %v972
    %1233 = vmatprep.subr.bf16.mxu0 %v978
    %1234 = vmatpush1.bf16.msra.mxu0 %v977
    %1235 = vmatprep.subr.bf16.mxu0 %v982
    %1236 = vmatpush1.bf16.msra.mxu0 %v981
    %1237 = vmatprep.subr.bf16.mxu0 %v986
    %1238 = vmatpush1.bf16.msra.mxu0 %v985
    %1239 = vmatprep.subr.bf16.mxu0 %v990
    %1240 = vmatpush1.bf16.msra.mxu0 %v989
    %1241 = vmatprep.subr.bf16.mxu0 %v994
    %1242 = vmatpush1.bf16.msra.mxu0 %v993
    %1243 = vmatprep.subr.bf16.mxu0 %v998
    %1244 = vmatpush1.bf16.msra.mxu0 %v997
    %1245 = vmatprep.subr.bf16.mxu0 %v1002
    %1246 = vmatpush1.bf16.msra.mxu0 %v1001
    %1247 = vmatprep.subr.bf16.mxu0 %v1006
    %1248 = vmatpush1.bf16.msra.mxu0 %v1005
    %1249 = vmatprep.subr.bf16.mxu0 %v1010
    %1250 = vmatpush1.bf16.msra.mxu0 %v1009
    %1251 = vmatprep.subr.bf16.mxu0 %v1014
    %1252 = vmatpush1.bf16.msra.mxu0 %v1013
    %1253 = vmatprep.subr.bf16.mxu0 %v1018
    %1254 = vmatpush1.bf16.msra.mxu0 %v1017
    %1255 = vmatprep.subr.bf16.mxu0 %v1022
    %1256 = vmatpush1.bf16.msra.mxu0 %v1021
    %1257 = vmatprep.subr.bf16.mxu0 %v1026
    %1258 = vmatpush1.bf16.msra.mxu0 %v1025
    %1259 = vmatprep.subr.bf16.mxu0 %v1030
    %1260 = vmatpush1.bf16.msra.mxu0 %v1029
    %1261 = vmatprep.subr.bf16.mxu0 %v1034
    %1262 = vmatpush1.bf16.msra.mxu0 %v1033
    %1263 = vmatprep.subr.bf16.mxu0 %v1038
    %1264 = vmatpush1.bf16.msra.mxu0 %v1037
    %1265 = vmatprep.mubr.bf16.mxu0 %v428
    %1266 = vmatmul.mubr.bf16.gmra.mrb[0].mxu0 %v427
    %v1267 = vpop.f32.mrb[0].mxu0
    %v1268 = vadd.f32 %v576, %v1267
    %v1269 = vpop.f32.mrb[0].mxu0
    %v1270 = vadd.f32 %v580, %v1269
    %v1271 = vpop.f32.mrb[0].mxu0
    %v1272 = vadd.f32 %v576, %v1271
    %v1273 = vpop.f32.mrb[0].mxu0
    %v1274 = vadd.f32 %v580, %v1273
    %1275 = vmatprep.mubr.bf16.mxu0 %v432
    %1276 = vmatmul.mubr.bf16.gmra.mrb[0].mxu0 %v431
    %v1277 = vpop.f32.mrb[0].mxu0
    %v1278 = vadd.f32 %v576, %v1277
    %v1279 = vpop.f32.mrb[0].mxu0
    %v1280 = vadd.f32 %v580, %v1279
    %v1281 = vpop.f32.mrb[0].mxu0
    %v1282 = vadd.f32 %v576, %v1281
    %v1283 = vpop.f32.mrb[0].mxu0
    %v1284 = vadd.f32 %v580, %v1283
    %1285 = vmatprep.mubr.bf16.mxu0 %v436
    %1286 = vmatmul.mubr.bf16.gmra.mrb[0].mxu0 %v435
    %v1287 = vpop.f32.mrb[0].mxu0
    %v1288 = vadd.f32 %v576, %v1287
    %v1289 = vpop.f32.mrb[0].mxu0
    %v1290 = vadd.f32 %v580, %v1289
    %v1291 = vpop.f32.mrb[0].mxu0
    %v1292 = vadd.f32 %v576, %v1291
    %v1293 = vpop.f32.mrb[0].mxu0
    %v1294 = vadd.f32 %v580, %v1293
    %1295 = vmatprep.mubr.bf16.mxu0 %v440
    %1296 = vmatmul.mubr.bf16.gmra.mrb[0].mxu0 %v439
    %v1297 = vpop.f32.mrb[0].mxu0
    %v1298 = vadd.f32 %v576, %v1297
    %v1299 = vpop.f32.mrb[0].mxu0
    %v1300 = vadd.f32 %v580, %v1299
    %v1301 = vpop.f32.mrb[0].mxu0
    %v1302 = vadd.f32 %v576, %v1301
    %v1303 = vpop.f32.mrb[0].mxu0
    %v1304 = vadd.f32 %v580, %v1303
    %1305 = vdwg.mxu0
    %1306 = vmatprep.subr.bf16.mxu0 %v1042
    %1307 = vmatpush1.bf16.msra.mxu0 %v1041
    %1308 = vmatprep.subr.bf16.mxu0 %v1046
    %1309 = vmatpush1.bf16.msra.mxu0 %v1045
    %1310 = vmatprep.subr.bf16.mxu0 %v1050
    %1311 = vmatpush1.bf16.msra.mxu0 %v1049
    %1312 = vmatprep.subr.bf16.mxu0 %v1054
    %1313 = vmatpush1.bf16.msra.mxu0 %v1053
    %1314 = vmatprep.subr.bf16.mxu0 %v1058
    %1315 = vmatpush1.bf16.msra.mxu0 %v1057
    %1316 = vmatprep.subr.bf16.mxu0 %v1062
    %1317 = vmatpush1.bf16.msra.mxu0 %v1061
    %1318 = vmatprep.subr.bf16.mxu0 %v1066
    %1319 = vmatpush1.bf16.msra.mxu0 %v1065
    %1320 = vmatprep.subr.bf16.mxu0 %v1070
    %1321 = vmatpush1.bf16.msra.mxu0 %v1069
    %1322 = vmatprep.subr.bf16.mxu0 %v1074
    %1323 = vmatpush1.bf16.msra.mxu0 %v1073
    %1324 = vmatprep.subr.bf16.mxu0 %v1078
    %1325 = vmatpush1.bf16.msra.mxu0 %v1077
    %1326 = vmatprep.subr.bf16.mxu0 %v1082
    %1327 = vmatpush1.bf16.msra.mxu0 %v1081
    %1328 = vmatprep.subr.bf16.mxu0 %v1086
    %1329 = vmatpush1.bf16.msra.mxu0 %v1085
    %1330 = vmatprep.subr.bf16.mxu0 %v1090
    %1331 = vmatpush1.bf16.msra.mxu0 %v1089
    %1332 = vmatprep.subr.bf16.mxu0 %v1094
    %1333 = vmatpush1.bf16.msra.mxu0 %v1093
    %1334 = vmatprep.subr.bf16.mxu0 %v1098
    %1335 = vmatpush1.bf16.msra.mxu0 %v1097
    %1336 = vmatprep.subr.bf16.mxu0 %v1102
    %1337 = vmatpush1.bf16.msra.mxu0 %v1101
    %1338 = vmatprep.mubr.bf16.mxu0 %v430
    %1339 = vmatmul.mubr.bf16.gmra.mrb[0].mxu0 %v429
    %v1340 = vpop.f32.mrb[0].mxu0
    %v1341 = vadd.f32 %v1268, %v1340
    %v1342 = vpop.f32.mrb[0].mxu0
    %v1343 = vadd.f32 %v1270, %v1342
    %v1344 = vpop.f32.mrb[0].mxu0
    %v1345 = vadd.f32 %v1272, %v1344
    %v1346 = vpop.f32.mrb[0].mxu0
    %v1347 = vadd.f32 %v1274, %v1346
    %1348 = vmatprep.mubr.bf16.mxu0 %v434
    %1349 = vmatmul.mubr.bf16.gmra.mrb[0].mxu0 %v433
    %v1350 = vpop.f32.mrb[0].mxu0
    %v1351 = vadd.f32 %v1278, %v1350
    %v1352 = vpop.f32.mrb[0].mxu0
    %v1353 = vadd.f32 %v1280, %v1352
    %v1354 = vpop.f32.mrb[0].mxu0
    %v1355 = vadd.f32 %v1282, %v1354
    %v1356 = vpop.f32.mrb[0].mxu0
    %v1357 = vadd.f32 %v1284, %v1356
    %1358 = vmatprep.mubr.bf16.mxu0 %v438
    %1359 = vmatmul.mubr.bf16.gmra.mrb[0].mxu0 %v437
    %v1360 = vpop.f32.mrb[0].mxu0
    %v1361 = vadd.f32 %v1288, %v1360
    %v1362 = vpop.f32.mrb[0].mxu0
    %v1363 = vadd.f32 %v1290, %v1362
    %v1364 = vpop.f32.mrb[0].mxu0
    %v1365 = vadd.f32 %v1292, %v1364
    %v1366 = vpop.f32.mrb[0].mxu0
    %v1367 = vadd.f32 %v1294, %v1366
    %1368 = vmatprep.mubr.bf16.mxu0 %v442
    %1369 = vmatmul.mubr.bf16.gmra.mrb[0].mxu0 %v441
    %v1370 = vpop.f32.mrb[0].mxu0
    %v1371 = vadd.f32 %v1298, %v1370
    %v1372 = vpop.f32.mrb[0].mxu0
    %v1373 = vadd.f32 %v1300, %v1372
    %v1374 = vpop.f32.mrb[0].mxu0
    %v1375 = vadd.f32 %v1302, %v1374
    %v1376 = vpop.f32.mrb[0].mxu0
    %v1377 = vadd.f32 %v1304, %v1376
    %1378 = vdwg.mxu0
    %1379 = vmatprep.subr.bf16.mxu0 %v980
    %1380 = vmatpush1.bf16.msra.mxu0 %v979
    %1381 = vmatprep.subr.bf16.mxu0 %v984
    %1382 = vmatpush1.bf16.msra.mxu0 %v983
    %1383 = vmatprep.subr.bf16.mxu0 %v988
    %1384 = vmatpush1.bf16.msra.mxu0 %v987
    %1385 = vmatprep.subr.bf16.mxu0 %v992
    %1386 = vmatpush1.bf16.msra.mxu0 %v991
    %1387 = vmatprep.subr.bf16.mxu0 %v996
    %1388 = vmatpush1.bf16.msra.mxu0 %v995
    %1389 = vmatprep.subr.bf16.mxu0 %v1000
    %1390 = vmatpush1.bf16.msra.mxu0 %v999
    %1391 = vmatprep.subr.bf16.mxu0 %v1004
    %1392 = vmatpush1.bf16.msra.mxu0 %v1003
    %1393 = vmatprep.subr.bf16.mxu0 %v1008
    %1394 = vmatpush1.bf16.msra.mxu0 %v1007
    %1395 = vmatprep.subr.bf16.mxu0 %v1012
    %1396 = vmatpush1.bf16.msra.mxu0 %v1011
    %1397 = vmatprep.subr.bf16.mxu0 %v1016
    %1398 = vmatpush1.bf16.msra.mxu0 %v1015
    %1399 = vmatprep.subr.bf16.mxu0 %v1020
    %1400 = vmatpush1.bf16.msra.mxu0 %v1019
    %1401 = vmatprep.subr.bf16.mxu0 %v1024
    %1402 = vmatpush1.bf16.msra.mxu0 %v1023
    %1403 = vmatprep.subr.bf16.mxu0 %v1028
    %1404 = vmatpush1.bf16.msra.mxu0 %v1027
    %1405 = vmatprep.subr.bf16.mxu0 %v1032
    %1406 = vmatpush1.bf16.msra.mxu0 %v1031
    %1407 = vmatprep.subr.bf16.mxu0 %v1036
    %1408 = vmatpush1.bf16.msra.mxu0 %v1035
    %1409 = vmatprep.subr.bf16.mxu0 %v1040
    %1410 = vmatpush1.bf16.msra.mxu0 %v1039
    %1411 = vmatprep.mubr.bf16.mxu0 %v428
    %1412 = vmatmul.mubr.bf16.gmra.mrb[0].mxu0 %v427
    %v1413 = vpop.f32.mrb[0].mxu0
    %v1414 = vadd.f32 %v584, %v1413
    %v1415 = vpop.f32.mrb[0].mxu0
    %v1416 = vadd.f32 %v588, %v1415
    %v1417 = vpop.f32.mrb[0].mxu0
    %v1418 = vadd.f32 %v584, %v1417
    %v1419 = vpop.f32.mrb[0].mxu0
    %v1420 = vadd.f32 %v588, %v1419
    %1421 = vmatprep.mubr.bf16.mxu0 %v432
    %1422 = vmatmul.mubr.bf16.gmra.mrb[0].mxu0 %v431
    %v1423 = vpop.f32.mrb[0].mxu0
    %v1424 = vadd.f32 %v584, %v1423
    %v1425 = vpop.f32.mrb[0].mxu0
    %v1426 = vadd.f32 %v588, %v1425
    %v1427 = vpop.f32.mrb[0].mxu0
    %v1428 = vadd.f32 %v584, %v1427
    %v1429 = vpop.f32.mrb[0].mxu0
    %v1430 = vadd.f32 %v588, %v1429
    %1431 = vmatprep.mubr.bf16.mxu0 %v436
    %1432 = vmatmul.mubr.bf16.gmra.mrb[0].mxu0 %v435
    %v1433 = vpop.f32.mrb[0].mxu0
    %v1434 = vadd.f32 %v584, %v1433
    %v1435 = vpop.f32.mrb[0].mxu0
    %v1436 = vadd.f32 %v588, %v1435
    %v1437 = vpop.f32.mrb[0].mxu0
    %v1438 = vadd.f32 %v584, %v1437
    %v1439 = vpop.f32.mrb[0].mxu0
    %v1440 = vadd.f32 %v588, %v1439
    %1441 = vmatprep.mubr.bf16.mxu0 %v440
    %1442 = vmatmul.mubr.bf16.gmra.mrb[0].mxu0 %v439
    %v1443 = vpop.f32.mrb[0].mxu0
    %v1444 = vadd.f32 %v584, %v1443
    %v1445 = vpop.f32.mrb[0].mxu0
    %v1446 = vadd.f32 %v588, %v1445
    %v1447 = vpop.f32.mrb[0].mxu0
    %v1448 = vadd.f32 %v584, %v1447
    %v1449 = vpop.f32.mrb[0].mxu0
    %v1450 = vadd.f32 %v588, %v1449
    %1451 = vdwg.mxu0
    %1452 = vmatprep.subr.bf16.mxu0 %v1044
    %1453 = vmatpush1.bf16.msra.mxu0 %v1043
    %1454 = vmatprep.subr.bf16.mxu0 %v1048
    %1455 = vmatpush1.bf16.msra.mxu0 %v1047
    %1456 = vmatprep.subr.bf16.mxu0 %v1052
    %1457 = vmatpush1.bf16.msra.mxu0 %v1051
    %1458 = vmatprep.subr.bf16.mxu0 %v1056
    %1459 = vmatpush1.bf16.msra.mxu0 %v1055
    %1460 = vmatprep.subr.bf16.mxu0 %v1060
    %1461 = vmatpush1.bf16.msra.mxu0 %v1059
    %1462 = vmatprep.subr.bf16.mxu0 %v1064
    %1463 = vmatpush1.bf16.msra.mxu0 %v1063
    %1464 = vmatprep.subr.bf16.mxu0 %v1068
    %1465 = vmatpush1.bf16.msra.mxu0 %v1067
    %1466 = vmatprep.subr.bf16.mxu0 %v1072
    %1467 = vmatpush1.bf16.msra.mxu0 %v1071
    %1468 = vmatprep.subr.bf16.mxu0 %v1076
    %1469 = vmatpush1.bf16.msra.mxu0 %v1075
    %1470 = vmatprep.subr.bf16.mxu0 %v1080
    %1471 = vmatpush1.bf16.msra.mxu0 %v1079
    %1472 = vmatprep.subr.bf16.mxu0 %v1084
    %1473 = vmatpush1.bf16.msra.mxu0 %v1083
    %1474 = vmatprep.subr.bf16.mxu0 %v1088
    %1475 = vmatpush1.bf16.msra.mxu0 %v1087
    %1476 = vmatprep.subr.bf16.mxu0 %v1092
    %1477 = vmatpush1.bf16.msra.mxu0 %v1091
    %1478 = vmatprep.subr.bf16.mxu0 %v1096
    %1479 = vmatpush1.bf16.msra.mxu0 %v1095
    %1480 = vmatprep.subr.bf16.mxu0 %v1100
    %1481 = vmatpush1.bf16.msra.mxu0 %v1099
    %1482 = vmatprep.subr.bf16.mxu0 %v1104
    %1483 = vmatpush1.bf16.msra.mxu0 %v1103
    %1484 = vmatprep.mubr.bf16.mxu0 %v430
    %1485 = vmatmul.mubr.bf16.gmra.mrb[0].mxu0 %v429
    %v1486 = vpop.f32.mrb[0].mxu0
    %v1487 = vadd.f32 %v1414, %v1486
    %v1488 = vpop.f32.mrb[0].mxu0
    %v1489 = vadd.f32 %v1416, %v1488
    %v1490 = vpop.f32.mrb[0].mxu0
    %v1491 = vadd.f32 %v1418, %v1490
    %v1492 = vpop.f32.mrb[0].mxu0
    %v1493 = vadd.f32 %v1420, %v1492
    %1494 = vmatprep.mubr.bf16.mxu0 %v434
    %1495 = vmatmul.mubr.bf16.gmra.mrb[0].mxu0 %v433
    %v1496 = vpop.f32.mrb[0].mxu0
    %v1497 = vadd.f32 %v1424, %v1496
    %v1498 = vpop.f32.mrb[0].mxu0
    %v1499 = vadd.f32 %v1426, %v1498
    %v1500 = vpop.f32.mrb[0].mxu0
    %v1501 = vadd.f32 %v1428, %v1500
    %v1502 = vpop.f32.mrb[0].mxu0
    %v1503 = vadd.f32 %v1430, %v1502
    %1504 = vmatprep.mubr.bf16.mxu0 %v438
    %1505 = vmatmul.mubr.bf16.gmra.mrb[0].mxu0 %v437
    %v1506 = vpop.f32.mrb[0].mxu0
    %v1507 = vadd.f32 %v1434, %v1506
    %v1508 = vpop.f32.mrb[0].mxu0
    %v1509 = vadd.f32 %v1436, %v1508
    %v1510 = vpop.f32.mrb[0].mxu0
    %v1511 = vadd.f32 %v1438, %v1510
    %v1512 = vpop.f32.mrb[0].mxu0
    %v1513 = vadd.f32 %v1440, %v1512
    %1514 = vmatprep.mubr.bf16.mxu0 %v442
    %1515 = vmatmul.mubr.bf16.gmra.mrb[0].mxu0 %v441
    %v1516 = vpop.f32.mrb[0].mxu0
    %v1517 = vadd.f32 %v1444, %v1516
    %v1518 = vpop.f32.mrb[0].mxu0
    %v1519 = vadd.f32 %v1446, %v1518
    %v1520 = vpop.f32.mrb[0].mxu0
    %v1521 = vadd.f32 %v1448, %v1520
    %v1522 = vpop.f32.mrb[0].mxu0
    %v1523 = vadd.f32 %v1450, %v1522
    %1524 = vdwg.mxu0
    %v1525 = vmax.f32 %v1341, 0.0
    %v1526 = vmax.f32 %v1343, 0.0
    %v1527 = vmax.f32 %v1487, 0.0
    %v1528 = vmax.f32 %v1489, 0.0
    %v1529 = vmax.f32 %v1345, 0.0
    %v1530 = vmax.f32 %v1347, 0.0
    %v1531 = vmax.f32 %v1491, 0.0
    %v1532 = vmax.f32 %v1493, 0.0
    %v1533 = vmax.f32 %v1351, 0.0
    %v1534 = vmax.f32 %v1353, 0.0
    %v1535 = vmax.f32 %v1497, 0.0
    %v1536 = vmax.f32 %v1499, 0.0
    %v1537 = vmax.f32 %v1355, 0.0
    %v1538 = vmax.f32 %v1357, 0.0
    %v1539 = vmax.f32 %v1501, 0.0
    %v1540 = vmax.f32 %v1503, 0.0
    %v1541 = vmax.f32 %v1361, 0.0
    %v1542 = vmax.f32 %v1363, 0.0
    %v1543 = vmax.f32 %v1507, 0.0
    %v1544 = vmax.f32 %v1509, 0.0
    %v1545 = vmax.f32 %v1365, 0.0
    %v1546 = vmax.f32 %v1367, 0.0
    %v1547 = vmax.f32 %v1511, 0.0
    %v1548 = vmax.f32 %v1513, 0.0
    %v1549 = vmax.f32 %v1371, 0.0
    %v1550 = vmax.f32 %v1373, 0.0
    %v1551 = vmax.f32 %v1517, 0.0
    %v1552 = vmax.f32 %v1519, 0.0
    %v1553 = vmax.f32 %v1375, 0.0
    %v1554 = vmax.f32 %v1377, 0.0
    %v1555 = vmax.f32 %v1521, 0.0
    %v1556 = vmax.f32 %v1523, 0.0
    %v1557 = vpack.c.bf16 %v1529, %v1525
    %v1558 = vpack.c.bf16 %v1530, %v1526
    %v1559 = vpack.c.bf16 %v1531, %v1527
    %v1560 = vpack.c.bf16 %v1532, %v1528
    %v1561 = vpack.c.bf16 %v1537, %v1533
    %v1562 = vpack.c.bf16 %v1538, %v1534
    %v1563 = vpack.c.bf16 %v1539, %v1535
    %v1564 = vpack.c.bf16 %v1540, %v1536
    %v1565 = vpack.c.bf16 %v1545, %v1541
    %v1566 = vpack.c.bf16 %v1546, %v1542
    %v1567 = vpack.c.bf16 %v1547, %v1543
    %v1568 = vpack.c.bf16 %v1548, %v1544
    %v1569 = vpack.c.bf16 %v1553, %v1549
    %v1570 = vpack.c.bf16 %v1554, %v1550
    %v1571 = vpack.c.bf16 %v1555, %v1551
    %v1572 = vpack.c.bf16 %v1556, %v1552
    %v1573 = vld [vmem:[#allocation7] sm:$0xff]
    %v1574 = vld [vmem:[#allocation7 + $0x8] sm:$0xff]
    %v1575 = vld [vmem:[#allocation7 + $0x10] sm:$0xff]
    %v1576 = vld [vmem:[#allocation7 + $0x18] sm:$0xff]
    %v1577 = vld [vmem:[#allocation7 + $0x20] sm:$0xff]
    %v1578 = vld [vmem:[#allocation7 + $0x28] sm:$0xff]
    %v1579 = vld [vmem:[#allocation7 + $0x30] sm:$0xff]
    %v1580 = vld [vmem:[#allocation7 + $0x38] sm:$0xff]
    %v1581 = vld [vmem:[#allocation7 + $0x40] sm:$0xff]
    %v1582 = vld [vmem:[#allocation7 + $0x48] sm:$0xff]
    %v1583 = vld [vmem:[#allocation7 + $0x50] sm:$0xff]
    %v1584 = vld [vmem:[#allocation7 + $0x58] sm:$0xff]
    %v1585 = vld [vmem:[#allocation7 + $0x60] sm:$0xff]
    %v1586 = vld [vmem:[#allocation7 + $0x68] sm:$0xff]
    %v1587 = vld [vmem:[#allocation7 + $0x70] sm:$0xff]
    %v1588 = vld [vmem:[#allocation7 + $0x78] sm:$0xff]
    %v1589 = vld [vmem:[#allocation7 + $0x80] sm:$0xff]
    %v1590 = vld [vmem:[#allocation7 + $0x88] sm:$0xff]
    %v1591 = vld [vmem:[#allocation7 + $0x90] sm:$0xff]
    %v1592 = vld [vmem:[#allocation7 + $0x98] sm:$0xff]
    %v1593 = vld [vmem:[#allocation7 + $0xa0] sm:$0xff]
    %v1594 = vld [vmem:[#allocation7 + $0xa8] sm:$0xff]
    %v1595 = vld [vmem:[#allocation7 + $0xb0] sm:$0xff]
    %v1596 = vld [vmem:[#allocation7 + $0xb8] sm:$0xff]
    %v1597 = vld [vmem:[#allocation7 + $0xc0] sm:$0xff]
    %v1598 = vld [vmem:[#allocation7 + $0xc8] sm:$0xff]
    %v1599 = vld [vmem:[#allocation7 + $0xd0] sm:$0xff]
    %v1600 = vld [vmem:[#allocation7 + $0xd8] sm:$0xff]
    %v1601 = vld [vmem:[#allocation7 + $0xe0] sm:$0xff]
    %v1602 = vld [vmem:[#allocation7 + $0xe8] sm:$0xff]
    %v1603 = vld [vmem:[#allocation7 + $0xf0] sm:$0xff]
    %v1604 = vld [vmem:[#allocation7 + $0xf8] sm:$0xff]
    %v1605 = vld [vmem:[#allocation7 + $0x100] sm:$0xff]
    %v1606 = vld [vmem:[#allocation7 + $0x108] sm:$0xff]
    %v1607 = vld [vmem:[#allocation7 + $0x110] sm:$0xff]
    %v1608 = vld [vmem:[#allocation7 + $0x118] sm:$0xff]
    %v1609 = vld [vmem:[#allocation7 + $0x120] sm:$0xff]
    %v1610 = vld [vmem:[#allocation7 + $0x128] sm:$0xff]
    %v1611 = vld [vmem:[#allocation7 + $0x130] sm:$0xff]
    %v1612 = vld [vmem:[#allocation7 + $0x138] sm:$0xff]
    %v1613 = vld [vmem:[#allocation7 + $0x140] sm:$0xff]
    %v1614 = vld [vmem:[#allocation7 + $0x148] sm:$0xff]
    %v1615 = vld [vmem:[#allocation7 + $0x150] sm:$0xff]
    %v1616 = vld [vmem:[#allocation7 + $0x158] sm:$0xff]
    %v1617 = vld [vmem:[#allocation7 + $0x160] sm:$0xff]
    %v1618 = vld [vmem:[#allocation7 + $0x168] sm:$0xff]
    %v1619 = vld [vmem:[#allocation7 + $0x170] sm:$0xff]
    %v1620 = vld [vmem:[#allocation7 + $0x178] sm:$0xff]
    %v1621 = vld [vmem:[#allocation7 + $0x180] sm:$0xff]
    %v1622 = vld [vmem:[#allocation7 + $0x188] sm:$0xff]
    %v1623 = vld [vmem:[#allocation7 + $0x190] sm:$0xff]
    %v1624 = vld [vmem:[#allocation7 + $0x198] sm:$0xff]
    %v1625 = vld [vmem:[#allocation7 + $0x1a0] sm:$0xff]
    %v1626 = vld [vmem:[#allocation7 + $0x1a8] sm:$0xff]
    %v1627 = vld [vmem:[#allocation7 + $0x1b0] sm:$0xff]
    %v1628 = vld [vmem:[#allocation7 + $0x1b8] sm:$0xff]
    %v1629 = vld [vmem:[#allocation7 + $0x1c0] sm:$0xff]
    %v1630 = vld [vmem:[#allocation7 + $0x1c8] sm:$0xff]
    %v1631 = vld [vmem:[#allocation7 + $0x1d0] sm:$0xff]
    %v1632 = vld [vmem:[#allocation7 + $0x1d8] sm:$0xff]
    %v1633 = vld [vmem:[#allocation7 + $0x1e0] sm:$0xff]
    %v1634 = vld [vmem:[#allocation7 + $0x1e8] sm:$0xff]
    %v1635 = vld [vmem:[#allocation7 + $0x1f0] sm:$0xff]
    %v1636 = vld [vmem:[#allocation7 + $0x1f8] sm:$0xff]
    %v1637 = vld [vmem:[#allocation7 + $0x200] sm:$0xff]
    %v1638 = vld [vmem:[#allocation7 + $0x208] sm:$0xff]
    %v1639 = vld [vmem:[#allocation7 + $0x210] sm:$0xff]
    %v1640 = vld [vmem:[#allocation7 + $0x218] sm:$0xff]
    %v1641 = vld [vmem:[#allocation7 + $0x220] sm:$0xff]
    %v1642 = vld [vmem:[#allocation7 + $0x228] sm:$0xff]
    %v1643 = vld [vmem:[#allocation7 + $0x230] sm:$0xff]
    %v1644 = vld [vmem:[#allocation7 + $0x238] sm:$0xff]
    %v1645 = vld [vmem:[#allocation7 + $0x240] sm:$0xff]
    %v1646 = vld [vmem:[#allocation7 + $0x248] sm:$0xff]
    %v1647 = vld [vmem:[#allocation7 + $0x250] sm:$0xff]
    %v1648 = vld [vmem:[#allocation7 + $0x258] sm:$0xff]
    %v1649 = vld [vmem:[#allocation7 + $0x260] sm:$0xff]
    %v1650 = vld [vmem:[#allocation7 + $0x268] sm:$0xff]
    %v1651 = vld [vmem:[#allocation7 + $0x270] sm:$0xff]
    %v1652 = vld [vmem:[#allocation7 + $0x278] sm:$0xff]
    %v1653 = vld [vmem:[#allocation7 + $0x280] sm:$0xff]
    %v1654 = vld [vmem:[#allocation7 + $0x288] sm:$0xff]
    %v1655 = vld [vmem:[#allocation7 + $0x290] sm:$0xff]
    %v1656 = vld [vmem:[#allocation7 + $0x298] sm:$0xff]
    %v1657 = vld [vmem:[#allocation7 + $0x2a0] sm:$0xff]
    %v1658 = vld [vmem:[#allocation7 + $0x2a8] sm:$0xff]
    %v1659 = vld [vmem:[#allocation7 + $0x2b0] sm:$0xff]
    %v1660 = vld [vmem:[#allocation7 + $0x2b8] sm:$0xff]
    %v1661 = vld [vmem:[#allocation7 + $0x2c0] sm:$0xff]
    %v1662 = vld [vmem:[#allocation7 + $0x2c8] sm:$0xff]
    %v1663 = vld [vmem:[#allocation7 + $0x2d0] sm:$0xff]
    %v1664 = vld [vmem:[#allocation7 + $0x2d8] sm:$0xff]
    %v1665 = vld [vmem:[#allocation7 + $0x2e0] sm:$0xff]
    %v1666 = vld [vmem:[#allocation7 + $0x2e8] sm:$0xff]
    %v1667 = vld [vmem:[#allocation7 + $0x2f0] sm:$0xff]
    %v1668 = vld [vmem:[#allocation7 + $0x2f8] sm:$0xff]
    %v1669 = vld [vmem:[#allocation7 + $0x300] sm:$0xff]
    %v1670 = vld [vmem:[#allocation7 + $0x308] sm:$0xff]
    %v1671 = vld [vmem:[#allocation7 + $0x310] sm:$0xff]
    %v1672 = vld [vmem:[#allocation7 + $0x318] sm:$0xff]
    %v1673 = vld [vmem:[#allocation7 + $0x320] sm:$0xff]
    %v1674 = vld [vmem:[#allocation7 + $0x328] sm:$0xff]
    %v1675 = vld [vmem:[#allocation7 + $0x330] sm:$0xff]
    %v1676 = vld [vmem:[#allocation7 + $0x338] sm:$0xff]
    %v1677 = vld [vmem:[#allocation7 + $0x340] sm:$0xff]
    %v1678 = vld [vmem:[#allocation7 + $0x348] sm:$0xff]
    %v1679 = vld [vmem:[#allocation7 + $0x350] sm:$0xff]
    %v1680 = vld [vmem:[#allocation7 + $0x358] sm:$0xff]
    %v1681 = vld [vmem:[#allocation7 + $0x360] sm:$0xff]
    %v1682 = vld [vmem:[#allocation7 + $0x368] sm:$0xff]
    %v1683 = vld [vmem:[#allocation7 + $0x370] sm:$0xff]
    %v1684 = vld [vmem:[#allocation7 + $0x378] sm:$0xff]
    %v1685 = vld [vmem:[#allocation7 + $0x380] sm:$0xff]
    %v1686 = vld [vmem:[#allocation7 + $0x388] sm:$0xff]
    %v1687 = vld [vmem:[#allocation7 + $0x390] sm:$0xff]
    %v1688 = vld [vmem:[#allocation7 + $0x398] sm:$0xff]
    %v1689 = vld [vmem:[#allocation7 + $0x3a0] sm:$0xff]
    %v1690 = vld [vmem:[#allocation7 + $0x3a8] sm:$0xff]
    %v1691 = vld [vmem:[#allocation7 + $0x3b0] sm:$0xff]
    %v1692 = vld [vmem:[#allocation7 + $0x3b8] sm:$0xff]
    %v1693 = vld [vmem:[#allocation7 + $0x3c0] sm:$0xff]
    %v1694 = vld [vmem:[#allocation7 + $0x3c8] sm:$0xff]
    %v1695 = vld [vmem:[#allocation7 + $0x3d0] sm:$0xff]
    %v1696 = vld [vmem:[#allocation7 + $0x3d8] sm:$0xff]
    %v1697 = vld [vmem:[#allocation7 + $0x3e0] sm:$0xff]
    %v1698 = vld [vmem:[#allocation7 + $0x3e8] sm:$0xff]
    %v1699 = vld [vmem:[#allocation7 + $0x3f0] sm:$0xff]
    %v1700 = vld [vmem:[#allocation7 + $0x3f8] sm:$0xff]
    %v1701 = vld [vmem:[%s6] sm:$0xf]
    %v1703 = vlaneseq
    %v1704 = vshrl.u32 %v1703, 7
    %v1705 = vsub.s32 0, %v1704
    %v1706 = vrot.slane %v1701, %v1705
    %v1707 = vlaneseq
    %v1708 = vshrl.u32 %v1707, 7
    %v1709 = vsub.s32 1, %v1708
    %v1710 = vrot.slane %v1701, %v1709
    %v1711 = vlaneseq
    %v1712 = vshrl.u32 %v1711, 7
    %v1713 = vsub.s32 2, %v1712
    %v1714 = vrot.slane %v1701, %v1713
    %v1715 = vlaneseq
    %v1716 = vshrl.u32 %v1715, 7
    %v1717 = vsub.s32 3, %v1716
    %v1718 = vrot.slane %v1701, %v1717
    %v1851 = vunpack.c.l.b16 %v1573
    %v1852 = vunpack.c.h.b16 %v1573
    %v1853 = vunpack.c.l.b16 %v1574
    %v1854 = vunpack.c.h.b16 %v1574
    %v1855 = vunpack.c.l.b16 %v1575
    %v1856 = vunpack.c.h.b16 %v1575
    %v1857 = vunpack.c.l.b16 %v1576
    %v1858 = vunpack.c.h.b16 %v1576
    %v1859 = vunpack.c.l.b16 %v1577
    %v1860 = vunpack.c.h.b16 %v1577
    %v1861 = vunpack.c.l.b16 %v1578
    %v1862 = vunpack.c.h.b16 %v1578
    %v1863 = vunpack.c.l.b16 %v1579
    %v1864 = vunpack.c.h.b16 %v1579
    %v1865 = vunpack.c.l.b16 %v1580
    %v1866 = vunpack.c.h.b16 %v1580
    %v1867 = vunpack.c.l.b16 %v1581
    %v1868 = vunpack.c.h.b16 %v1581
    %v1869 = vunpack.c.l.b16 %v1582
    %v1870 = vunpack.c.h.b16 %v1582
    %v1871 = vunpack.c.l.b16 %v1583
    %v1872 = vunpack.c.h.b16 %v1583
    %v1873 = vunpack.c.l.b16 %v1584
    %v1874 = vunpack.c.h.b16 %v1584
    %v1875 = vunpack.c.l.b16 %v1585
    %v1876 = vunpack.c.h.b16 %v1585
    %v1877 = vunpack.c.l.b16 %v1586
    %v1878 = vunpack.c.h.b16 %v1586
    %v1879 = vunpack.c.l.b16 %v1587
    %v1880 = vunpack.c.h.b16 %v1587
    %v1881 = vunpack.c.l.b16 %v1588
    %v1882 = vunpack.c.h.b16 %v1588
    %v1883 = vunpack.c.l.b16 %v1589
    %v1884 = vunpack.c.h.b16 %v1589
    %v1885 = vunpack.c.l.b16 %v1590
    %v1886 = vunpack.c.h.b16 %v1590
    %v1887 = vunpack.c.l.b16 %v1591
    %v1888 = vunpack.c.h.b16 %v1591
    %v1889 = vunpack.c.l.b16 %v1592
    %v1890 = vunpack.c.h.b16 %v1592
    %v1891 = vunpack.c.l.b16 %v1593
    %v1892 = vunpack.c.h.b16 %v1593
    %v1893 = vunpack.c.l.b16 %v1594
    %v1894 = vunpack.c.h.b16 %v1594
    %v1895 = vunpack.c.l.b16 %v1595
    %v1896 = vunpack.c.h.b16 %v1595
    %v1897 = vunpack.c.l.b16 %v1596
    %v1898 = vunpack.c.h.b16 %v1596
    %v1899 = vunpack.c.l.b16 %v1597
    %v1900 = vunpack.c.h.b16 %v1597
    %v1901 = vunpack.c.l.b16 %v1598
    %v1902 = vunpack.c.h.b16 %v1598
    %v1903 = vunpack.c.l.b16 %v1599
    %v1904 = vunpack.c.h.b16 %v1599
    %v1905 = vunpack.c.l.b16 %v1600
    %v1906 = vunpack.c.h.b16 %v1600
    %v1907 = vunpack.c.l.b16 %v1601
    %v1908 = vunpack.c.h.b16 %v1601
    %v1909 = vunpack.c.l.b16 %v1602
    %v1910 = vunpack.c.h.b16 %v1602
    %v1911 = vunpack.c.l.b16 %v1603
    %v1912 = vunpack.c.h.b16 %v1603
    %v1913 = vunpack.c.l.b16 %v1604
    %v1914 = vunpack.c.h.b16 %v1604
    %v1915 = vunpack.c.l.b16 %v1605
    %v1916 = vunpack.c.h.b16 %v1605
    %v1917 = vunpack.c.l.b16 %v1606
    %v1918 = vunpack.c.h.b16 %v1606
    %v1919 = vunpack.c.l.b16 %v1607
    %v1920 = vunpack.c.h.b16 %v1607
    %v1921 = vunpack.c.l.b16 %v1608
    %v1922 = vunpack.c.h.b16 %v1608
    %v1923 = vunpack.c.l.b16 %v1609
    %v1924 = vunpack.c.h.b16 %v1609
    %v1925 = vunpack.c.l.b16 %v1610
    %v1926 = vunpack.c.h.b16 %v1610
    %v1927 = vunpack.c.l.b16 %v1611
    %v1928 = vunpack.c.h.b16 %v1611
    %v1929 = vunpack.c.l.b16 %v1612
    %v1930 = vunpack.c.h.b16 %v1612
    %v1931 = vunpack.c.l.b16 %v1613
    %v1932 = vunpack.c.h.b16 %v1613
    %v1933 = vunpack.c.l.b16 %v1614
    %v1934 = vunpack.c.h.b16 %v1614
    %v1935 = vunpack.c.l.b16 %v1615
    %v1936 = vunpack.c.h.b16 %v1615
    %v1937 = vunpack.c.l.b16 %v1616
    %v1938 = vunpack.c.h.b16 %v1616
    %v1939 = vunpack.c.l.b16 %v1617
    %v1940 = vunpack.c.h.b16 %v1617
    %v1941 = vunpack.c.l.b16 %v1618
    %v1942 = vunpack.c.h.b16 %v1618
    %v1943 = vunpack.c.l.b16 %v1619
    %v1944 = vunpack.c.h.b16 %v1619
    %v1945 = vunpack.c.l.b16 %v1620
    %v1946 = vunpack.c.h.b16 %v1620
    %v1947 = vunpack.c.l.b16 %v1621
    %v1948 = vunpack.c.h.b16 %v1621
    %v1949 = vunpack.c.l.b16 %v1622
    %v1950 = vunpack.c.h.b16 %v1622
    %v1951 = vunpack.c.l.b16 %v1623
    %v1952 = vunpack.c.h.b16 %v1623
    %v1953 = vunpack.c.l.b16 %v1624
    %v1954 = vunpack.c.h.b16 %v1624
    %v1955 = vunpack.c.l.b16 %v1625
    %v1956 = vunpack.c.h.b16 %v1625
    %v1957 = vunpack.c.l.b16 %v1626
    %v1958 = vunpack.c.h.b16 %v1626
    %v1959 = vunpack.c.l.b16 %v1627
    %v1960 = vunpack.c.h.b16 %v1627
    %v1961 = vunpack.c.l.b16 %v1628
    %v1962 = vunpack.c.h.b16 %v1628
    %v1963 = vunpack.c.l.b16 %v1629
    %v1964 = vunpack.c.h.b16 %v1629
    %v1965 = vunpack.c.l.b16 %v1630
    %v1966 = vunpack.c.h.b16 %v1630
    %v1967 = vunpack.c.l.b16 %v1631
    %v1968 = vunpack.c.h.b16 %v1631
    %v1969 = vunpack.c.l.b16 %v1632
    %v1970 = vunpack.c.h.b16 %v1632
    %v1971 = vunpack.c.l.b16 %v1633
    %v1972 = vunpack.c.h.b16 %v1633
    %v1973 = vunpack.c.l.b16 %v1634
    %v1974 = vunpack.c.h.b16 %v1634
    %v1975 = vunpack.c.l.b16 %v1635
    %v1976 = vunpack.c.h.b16 %v1635
    %v1977 = vunpack.c.l.b16 %v1636
    %v1978 = vunpack.c.h.b16 %v1636
    %v1979 = vunpack.c.l.b16 %v1637
    %v1980 = vunpack.c.h.b16 %v1637
    %v1981 = vunpack.c.l.b16 %v1638
    %v1982 = vunpack.c.h.b16 %v1638
    %v1983 = vunpack.c.l.b16 %v1639
    %v1984 = vunpack.c.h.b16 %v1639
    %v1985 = vunpack.c.l.b16 %v1640
    %v1986 = vunpack.c.h.b16 %v1640
    %v1987 = vunpack.c.l.b16 %v1641
    %v1988 = vunpack.c.h.b16 %v1641
    %v1989 = vunpack.c.l.b16 %v1642
    %v1990 = vunpack.c.h.b16 %v1642
    %v1991 = vunpack.c.l.b16 %v1643
    %v1992 = vunpack.c.h.b16 %v1643
    %v1993 = vunpack.c.l.b16 %v1644
    %v1994 = vunpack.c.h.b16 %v1644
    %v1995 = vunpack.c.l.b16 %v1645
    %v1996 = vunpack.c.h.b16 %v1645
    %v1997 = vunpack.c.l.b16 %v1646
    %v1998 = vunpack.c.h.b16 %v1646
    %v1999 = vunpack.c.l.b16 %v1647
    %v2000 = vunpack.c.h.b16 %v1647
    %v2001 = vunpack.c.l.b16 %v1648
    %v2002 = vunpack.c.h.b16 %v1648
    %v2003 = vunpack.c.l.b16 %v1649
    %v2004 = vunpack.c.h.b16 %v1649
    %v2005 = vunpack.c.l.b16 %v1650
    %v2006 = vunpack.c.h.b16 %v1650
    %v2007 = vunpack.c.l.b16 %v1651
    %v2008 = vunpack.c.h.b16 %v1651
    %v2009 = vunpack.c.l.b16 %v1652
    %v2010 = vunpack.c.h.b16 %v1652
    %v2011 = vunpack.c.l.b16 %v1653
    %v2012 = vunpack.c.h.b16 %v1653
    %v2013 = vunpack.c.l.b16 %v1654
    %v2014 = vunpack.c.h.b16 %v1654
    %v2015 = vunpack.c.l.b16 %v1655
    %v2016 = vunpack.c.h.b16 %v1655
    %v2017 = vunpack.c.l.b16 %v1656
    %v2018 = vunpack.c.h.b16 %v1656
    %v2019 = vunpack.c.l.b16 %v1657
    %v2020 = vunpack.c.h.b16 %v1657
    %v2021 = vunpack.c.l.b16 %v1658
    %v2022 = vunpack.c.h.b16 %v1658
    %v2023 = vunpack.c.l.b16 %v1659
    %v2024 = vunpack.c.h.b16 %v1659
    %v2025 = vunpack.c.l.b16 %v1660
    %v2026 = vunpack.c.h.b16 %v1660
    %v2027 = vunpack.c.l.b16 %v1661
    %v2028 = vunpack.c.h.b16 %v1661
    %v2029 = vunpack.c.l.b16 %v1662
    %v2030 = vunpack.c.h.b16 %v1662
    %v2031 = vunpack.c.l.b16 %v1663
    %v2032 = vunpack.c.h.b16 %v1663
    %v2033 = vunpack.c.l.b16 %v1664
    %v2034 = vunpack.c.h.b16 %v1664
    %v2035 = vunpack.c.l.b16 %v1665
    %v2036 = vunpack.c.h.b16 %v1665
    %v2037 = vunpack.c.l.b16 %v1666
    %v2038 = vunpack.c.h.b16 %v1666
    %v2039 = vunpack.c.l.b16 %v1667
    %v2040 = vunpack.c.h.b16 %v1667
    %v2041 = vunpack.c.l.b16 %v1668
    %v2042 = vunpack.c.h.b16 %v1668
    %v2043 = vunpack.c.l.b16 %v1669
    %v2044 = vunpack.c.h.b16 %v1669
    %v2045 = vunpack.c.l.b16 %v1670
    %v2046 = vunpack.c.h.b16 %v1670
    %v2047 = vunpack.c.l.b16 %v1671
    %v2048 = vunpack.c.h.b16 %v1671
    %v2049 = vunpack.c.l.b16 %v1672
    %v2050 = vunpack.c.h.b16 %v1672
    %v2051 = vunpack.c.l.b16 %v1673
    %v2052 = vunpack.c.h.b16 %v1673
    %v2053 = vunpack.c.l.b16 %v1674
    %v2054 = vunpack.c.h.b16 %v1674
    %v2055 = vunpack.c.l.b16 %v1675
    %v2056 = vunpack.c.h.b16 %v1675
    %v2057 = vunpack.c.l.b16 %v1676
    %v2058 = vunpack.c.h.b16 %v1676
    %v2059 = vunpack.c.l.b16 %v1677
    %v2060 = vunpack.c.h.b16 %v1677
    %v2061 = vunpack.c.l.b16 %v1678
    %v2062 = vunpack.c.h.b16 %v1678
    %v2063 = vunpack.c.l.b16 %v1679
    %v2064 = vunpack.c.h.b16 %v1679
    %v2065 = vunpack.c.l.b16 %v1680
    %v2066 = vunpack.c.h.b16 %v1680
    %v2067 = vunpack.c.l.b16 %v1681
    %v2068 = vunpack.c.h.b16 %v1681
    %v2069 = vunpack.c.l.b16 %v1682
    %v2070 = vunpack.c.h.b16 %v1682
    %v2071 = vunpack.c.l.b16 %v1683
    %v2072 = vunpack.c.h.b16 %v1683
    %v2073 = vunpack.c.l.b16 %v1684
    %v2074 = vunpack.c.h.b16 %v1684
    %v2075 = vunpack.c.l.b16 %v1685
    %v2076 = vunpack.c.h.b16 %v1685
    %v2077 = vunpack.c.l.b16 %v1686
    %v2078 = vunpack.c.h.b16 %v1686
    %v2079 = vunpack.c.l.b16 %v1687
    %v2080 = vunpack.c.h.b16 %v1687
    %v2081 = vunpack.c.l.b16 %v1688
    %v2082 = vunpack.c.h.b16 %v1688
    %v2083 = vunpack.c.l.b16 %v1689
    %v2084 = vunpack.c.h.b16 %v1689
    %v2085 = vunpack.c.l.b16 %v1690
    %v2086 = vunpack.c.h.b16 %v1690
    %v2087 = vunpack.c.l.b16 %v1691
    %v2088 = vunpack.c.h.b16 %v1691
    %v2089 = vunpack.c.l.b16 %v1692
    %v2090 = vunpack.c.h.b16 %v1692
    %v2091 = vunpack.c.l.b16 %v1693
    %v2092 = vunpack.c.h.b16 %v1693
    %v2093 = vunpack.c.l.b16 %v1694
    %v2094 = vunpack.c.h.b16 %v1694
    %v2095 = vunpack.c.l.b16 %v1695
    %v2096 = vunpack.c.h.b16 %v1695
    %v2097 = vunpack.c.l.b16 %v1696
    %v2098 = vunpack.c.h.b16 %v1696
    %v2099 = vunpack.c.l.b16 %v1697
    %v2100 = vunpack.c.h.b16 %v1697
    %v2101 = vunpack.c.l.b16 %v1698
    %v2102 = vunpack.c.h.b16 %v1698
    %v2103 = vunpack.c.l.b16 %v1699
    %v2104 = vunpack.c.h.b16 %v1699
    %v2105 = vunpack.c.l.b16 %v1700
    %v2106 = vunpack.c.h.b16 %v1700
    %v2107 = vpack.c.b16 %v1855, %v1851
    %v2108 = vpack.c.b16 %v1856, %v1852
    %v2109 = vpack.c.b16 %v1857, %v1853
    %v2110 = vpack.c.b16 %v1858, %v1854
    %v2111 = vpack.c.b16 %v1863, %v1859
    %v2112 = vpack.c.b16 %v1864, %v1860
    %v2113 = vpack.c.b16 %v1865, %v1861
    %v2114 = vpack.c.b16 %v1866, %v1862
    %v2115 = vpack.c.b16 %v1871, %v1867
    %v2116 = vpack.c.b16 %v1872, %v1868
    %v2117 = vpack.c.b16 %v1873, %v1869
    %v2118 = vpack.c.b16 %v1874, %v1870
    %v2119 = vpack.c.b16 %v1879, %v1875
    %v2120 = vpack.c.b16 %v1880, %v1876
    %v2121 = vpack.c.b16 %v1881, %v1877
    %v2122 = vpack.c.b16 %v1882, %v1878
    %v2123 = vpack.c.b16 %v1887, %v1883
    %v2124 = vpack.c.b16 %v1888, %v1884
    %v2125 = vpack.c.b16 %v1889, %v1885
    %v2126 = vpack.c.b16 %v1890, %v1886
    %v2127 = vpack.c.b16 %v1895, %v1891
    %v2128 = vpack.c.b16 %v1896, %v1892
    %v2129 = vpack.c.b16 %v1897, %v1893
    %v2130 = vpack.c.b16 %v1898, %v1894
    %v2131 = vpack.c.b16 %v1903, %v1899
    %v2132 = vpack.c.b16 %v1904, %v1900
    %v2133 = vpack.c.b16 %v1905, %v1901
    %v2134 = vpack.c.b16 %v1906, %v1902
    %v2135 = vpack.c.b16 %v1911, %v1907
    %v2136 = vpack.c.b16 %v1912, %v1908
    %v2137 = vpack.c.b16 %v1913, %v1909
    %v2138 = vpack.c.b16 %v1914, %v1910
    %v2139 = vpack.c.b16 %v1919, %v1915
    %v2140 = vpack.c.b16 %v1920, %v1916
    %v2141 = vpack.c.b16 %v1921, %v1917
    %v2142 = vpack.c.b16 %v1922, %v1918
    %v2143 = vpack.c.b16 %v1927, %v1923
    %v2144 = vpack.c.b16 %v1928, %v1924
    %v2145 = vpack.c.b16 %v1929, %v1925
    %v2146 = vpack.c.b16 %v1930, %v1926
    %v2147 = vpack.c.b16 %v1935, %v1931
    %v2148 = vpack.c.b16 %v1936, %v1932
    %v2149 = vpack.c.b16 %v1937, %v1933
    %v2150 = vpack.c.b16 %v1938, %v1934
    %v2151 = vpack.c.b16 %v1943, %v1939
    %v2152 = vpack.c.b16 %v1944, %v1940
    %v2153 = vpack.c.b16 %v1945, %v1941
    %v2154 = vpack.c.b16 %v1946, %v1942
    %v2155 = vpack.c.b16 %v1951, %v1947
    %v2156 = vpack.c.b16 %v1952, %v1948
    %v2157 = vpack.c.b16 %v1953, %v1949
    %v2158 = vpack.c.b16 %v1954, %v1950
    %v2159 = vpack.c.b16 %v1959, %v1955
    %v2160 = vpack.c.b16 %v1960, %v1956
    %v2161 = vpack.c.b16 %v1961, %v1957
    %v2162 = vpack.c.b16 %v1962, %v1958
    %v2163 = vpack.c.b16 %v1967, %v1963
    %v2164 = vpack.c.b16 %v1968, %v1964
    %v2165 = vpack.c.b16 %v1969, %v1965
    %v2166 = vpack.c.b16 %v1970, %v1966
    %v2167 = vpack.c.b16 %v1975, %v1971
    %v2168 = vpack.c.b16 %v1976, %v1972
    %v2169 = vpack.c.b16 %v1977, %v1973
    %v2170 = vpack.c.b16 %v1978, %v1974
    %v2171 = vpack.c.b16 %v1983, %v1979
    %v2172 = vpack.c.b16 %v1984, %v1980
    %v2173 = vpack.c.b16 %v1985, %v1981
    %v2174 = vpack.c.b16 %v1986, %v1982
    %v2175 = vpack.c.b16 %v1991, %v1987
    %v2176 = vpack.c.b16 %v1992, %v1988
    %v2177 = vpack.c.b16 %v1993, %v1989
    %v2178 = vpack.c.b16 %v1994, %v1990
    %v2179 = vpack.c.b16 %v1999, %v1995
    %v2180 = vpack.c.b16 %v2000, %v1996
    %v2181 = vpack.c.b16 %v2001, %v1997
    %v2182 = vpack.c.b16 %v2002, %v1998
    %v2183 = vpack.c.b16 %v2007, %v2003
    %v2184 = vpack.c.b16 %v2008, %v2004
    %v2185 = vpack.c.b16 %v2009, %v2005
    %v2186 = vpack.c.b16 %v2010, %v2006
    %v2187 = vpack.c.b16 %v2015, %v2011
    %v2188 = vpack.c.b16 %v2016, %v2012
    %v2189 = vpack.c.b16 %v2017, %v2013
    %v2190 = vpack.c.b16 %v2018, %v2014
    %v2191 = vpack.c.b16 %v2023, %v2019
    %v2192 = vpack.c.b16 %v2024, %v2020
    %v2193 = vpack.c.b16 %v2025, %v2021
    %v2194 = vpack.c.b16 %v2026, %v2022
    %v2195 = vpack.c.b16 %v2031, %v2027
    %v2196 = vpack.c.b16 %v2032, %v2028
    %v2197 = vpack.c.b16 %v2033, %v2029
    %v2198 = vpack.c.b16 %v2034, %v2030
    %v2199 = vpack.c.b16 %v2039, %v2035
    %v2200 = vpack.c.b16 %v2040, %v2036
    %v2201 = vpack.c.b16 %v2041, %v2037
    %v2202 = vpack.c.b16 %v2042, %v2038
    %v2203 = vpack.c.b16 %v2047, %v2043
    %v2204 = vpack.c.b16 %v2048, %v2044
    %v2205 = vpack.c.b16 %v2049, %v2045
    %v2206 = vpack.c.b16 %v2050, %v2046
    %v2207 = vpack.c.b16 %v2055, %v2051
    %v2208 = vpack.c.b16 %v2056, %v2052
    %v2209 = vpack.c.b16 %v2057, %v2053
    %v2210 = vpack.c.b16 %v2058, %v2054
    %v2211 = vpack.c.b16 %v2063, %v2059
    %v2212 = vpack.c.b16 %v2064, %v2060
    %v2213 = vpack.c.b16 %v2065, %v2061
    %v2214 = vpack.c.b16 %v2066, %v2062
    %v2215 = vpack.c.b16 %v2071, %v2067
    %v2216 = vpack.c.b16 %v2072, %v2068
    %v2217 = vpack.c.b16 %v2073, %v2069
    %v2218 = vpack.c.b16 %v2074, %v2070
    %v2219 = vpack.c.b16 %v2079, %v2075
    %v2220 = vpack.c.b16 %v2080, %v2076
    %v2221 = vpack.c.b16 %v2081, %v2077
    %v2222 = vpack.c.b16 %v2082, %v2078
    %v2223 = vpack.c.b16 %v2087, %v2083
    %v2224 = vpack.c.b16 %v2088, %v2084
    %v2225 = vpack.c.b16 %v2089, %v2085
    %v2226 = vpack.c.b16 %v2090, %v2086
    %v2227 = vpack.c.b16 %v2095, %v2091
    %v2228 = vpack.c.b16 %v2096, %v2092
    %v2229 = vpack.c.b16 %v2097, %v2093
    %v2230 = vpack.c.b16 %v2098, %v2094
    %v2231 = vpack.c.b16 %v2103, %v2099
    %v2232 = vpack.c.b16 %v2104, %v2100
    %v2233 = vpack.c.b16 %v2105, %v2101
    %v2234 = vpack.c.b16 %v2106, %v2102
    %2363 = vmatprep.subr.bf16.mxu0 %v2108
    %2364 = vmatpush1.bf16.msra.mxu0 %v2107
    %2365 = vmatprep.subr.bf16.mxu0 %v2112
    %2366 = vmatpush1.bf16.msra.mxu0 %v2111
    %2367 = vmatprep.subr.bf16.mxu0 %v2116
    %2368 = vmatpush1.bf16.msra.mxu0 %v2115
    %2369 = vmatprep.subr.bf16.mxu0 %v2120
    %2370 = vmatpush1.bf16.msra.mxu0 %v2119
    %2371 = vmatprep.subr.bf16.mxu0 %v2124
    %2372 = vmatpush1.bf16.msra.mxu0 %v2123
    %2373 = vmatprep.subr.bf16.mxu0 %v2128
    %2374 = vmatpush1.bf16.msra.mxu0 %v2127
    %2375 = vmatprep.subr.bf16.mxu0 %v2132
    %2376 = vmatpush1.bf16.msra.mxu0 %v2131
    %2377 = vmatprep.subr.bf16.mxu0 %v2136
    %2378 = vmatpush1.bf16.msra.mxu0 %v2135
    %2379 = vmatprep.subr.bf16.mxu0 %v2140
    %2380 = vmatpush1.bf16.msra.mxu0 %v2139
    %2381 = vmatprep.subr.bf16.mxu0 %v2144
    %2382 = vmatpush1.bf16.msra.mxu0 %v2143
    %2383 = vmatprep.subr.bf16.mxu0 %v2148
    %2384 = vmatpush1.bf16.msra.mxu0 %v2147
    %2385 = vmatprep.subr.bf16.mxu0 %v2152
    %2386 = vmatpush1.bf16.msra.mxu0 %v2151
    %2387 = vmatprep.subr.bf16.mxu0 %v2156
    %2388 = vmatpush1.bf16.msra.mxu0 %v2155
    %2389 = vmatprep.subr.bf16.mxu0 %v2160
    %2390 = vmatpush1.bf16.msra.mxu0 %v2159
    %2391 = vmatprep.subr.bf16.mxu0 %v2164
    %2392 = vmatpush1.bf16.msra.mxu0 %v2163
    %2393 = vmatprep.subr.bf16.mxu0 %v2168
    %2394 = vmatpush1.bf16.msra.mxu0 %v2167
    %2395 = vmatprep.mubr.bf16.mxu0 %v1558
    %2396 = vmatmul.mubr.bf16.gmra.mrb[0].mxu0 %v1557
    %v2397 = vpop.f32.mrb[0].mxu0
    %v2398 = vadd.f32 %v1706, %v2397
    %v2399 = vpop.f32.mrb[0].mxu0
    %v2400 = vadd.f32 %v1710, %v2399
    %v2401 = vpop.f32.mrb[0].mxu0
    %v2402 = vadd.f32 %v1706, %v2401
    %v2403 = vpop.f32.mrb[0].mxu0
    %v2404 = vadd.f32 %v1710, %v2403
    %2405 = vmatprep.mubr.bf16.mxu0 %v1562
    %2406 = vmatmul.mubr.bf16.gmra.mrb[0].mxu0 %v1561
    %v2407 = vpop.f32.mrb[0].mxu0
    %v2408 = vadd.f32 %v1706, %v2407
    %v2409 = vpop.f32.mrb[0].mxu0
    %v2410 = vadd.f32 %v1710, %v2409
    %v2411 = vpop.f32.mrb[0].mxu0
    %v2412 = vadd.f32 %v1706, %v2411
    %v2413 = vpop.f32.mrb[0].mxu0
    %v2414 = vadd.f32 %v1710, %v2413
    %2415 = vmatprep.mubr.bf16.mxu0 %v1566
    %2416 = vmatmul.mubr.bf16.gmra.mrb[0].mxu0 %v1565
    %v2417 = vpop.f32.mrb[0].mxu0
    %v2418 = vadd.f32 %v1706, %v2417
    %v2419 = vpop.f32.mrb[0].mxu0
    %v2420 = vadd.f32 %v1710, %v2419
    %v2421 = vpop.f32.mrb[0].mxu0
    %v2422 = vadd.f32 %v1706, %v2421
    %v2423 = vpop.f32.mrb[0].mxu0
    %v2424 = vadd.f32 %v1710, %v2423
    %2425 = vmatprep.mubr.bf16.mxu0 %v1570
    %2426 = vmatmul.mubr.bf16.gmra.mrb[0].mxu0 %v1569
    %v2427 = vpop.f32.mrb[0].mxu0
    %v2428 = vadd.f32 %v1706, %v2427
    %v2429 = vpop.f32.mrb[0].mxu0
    %v2430 = vadd.f32 %v1710, %v2429
    %v2431 = vpop.f32.mrb[0].mxu0
    %v2432 = vadd.f32 %v1706, %v2431
    %v2433 = vpop.f32.mrb[0].mxu0
    %v2434 = vadd.f32 %v1710, %v2433
    %2435 = vdwg.mxu0
    %2436 = vmatprep.subr.bf16.mxu0 %v2172
    %2437 = vmatpush1.bf16.msra.mxu0 %v2171
    %2438 = vmatprep.subr.bf16.mxu0 %v2176
    %2439 = vmatpush1.bf16.msra.mxu0 %v2175
    %2440 = vmatprep.subr.bf16.mxu0 %v2180
    %2441 = vmatpush1.bf16.msra.mxu0 %v2179
    %2442 = vmatprep.subr.bf16.mxu0 %v2184
    %2443 = vmatpush1.bf16.msra.mxu0 %v2183
    %2444 = vmatprep.subr.bf16.mxu0 %v2188
    %2445 = vmatpush1.bf16.msra.mxu0 %v2187
    %2446 = vmatprep.subr.bf16.mxu0 %v2192
    %2447 = vmatpush1.bf16.msra.mxu0 %v2191
    %2448 = vmatprep.subr.bf16.mxu0 %v2196
    %2449 = vmatpush1.bf16.msra.mxu0 %v2195
    %2450 = vmatprep.subr.bf16.mxu0 %v2200
    %2451 = vmatpush1.bf16.msra.mxu0 %v2199
    %2452 = vmatprep.subr.bf16.mxu0 %v2204
    %2453 = vmatpush1.bf16.msra.mxu0 %v2203
    %2454 = vmatprep.subr.bf16.mxu0 %v2208
    %2455 = vmatpush1.bf16.msra.mxu0 %v2207
    %2456 = vmatprep.subr.bf16.mxu0 %v2212
    %2457 = vmatpush1.bf16.msra.mxu0 %v2211
    %2458 = vmatprep.subr.bf16.mxu0 %v2216
    %2459 = vmatpush1.bf16.msra.mxu0 %v2215
    %2460 = vmatprep.subr.bf16.mxu0 %v2220
    %2461 = vmatpush1.bf16.msra.mxu0 %v2219
    %2462 = vmatprep.subr.bf16.mxu0 %v2224
    %2463 = vmatpush1.bf16.msra.mxu0 %v2223
    %2464 = vmatprep.subr.bf16.mxu0 %v2228
    %2465 = vmatpush1.bf16.msra.mxu0 %v2227
    %2466 = vmatprep.subr.bf16.mxu0 %v2232
    %2467 = vmatpush1.bf16.msra.mxu0 %v2231
    %2468 = vmatprep.mubr.bf16.mxu0 %v1560
    %2469 = vmatmul.mubr.bf16.gmra.mrb[0].mxu0 %v1559
    %v2470 = vpop.f32.mrb[0].mxu0
    %v2471 = vadd.f32 %v2398, %v2470
    %v2472 = vpop.f32.mrb[0].mxu0
    %v2473 = vadd.f32 %v2400, %v2472
    %v2474 = vpop.f32.mrb[0].mxu0
    %v2475 = vadd.f32 %v2402, %v2474
    %v2476 = vpop.f32.mrb[0].mxu0
    %v2477 = vadd.f32 %v2404, %v2476
    %2478 = vmatprep.mubr.bf16.mxu0 %v1564
    %2479 = vmatmul.mubr.bf16.gmra.mrb[0].mxu0 %v1563
    %v2480 = vpop.f32.mrb[0].mxu0
    %v2481 = vadd.f32 %v2408, %v2480
    %v2482 = vpop.f32.mrb[0].mxu0
    %v2483 = vadd.f32 %v2410, %v2482
    %v2484 = vpop.f32.mrb[0].mxu0
    %v2485 = vadd.f32 %v2412, %v2484
    %v2486 = vpop.f32.mrb[0].mxu0
    %v2487 = vadd.f32 %v2414, %v2486
    %2488 = vmatprep.mubr.bf16.mxu0 %v1568
    %2489 = vmatmul.mubr.bf16.gmra.mrb[0].mxu0 %v1567
    %v2490 = vpop.f32.mrb[0].mxu0
    %v2491 = vadd.f32 %v2418, %v2490
    %v2492 = vpop.f32.mrb[0].mxu0
    %v2493 = vadd.f32 %v2420, %v2492
    %v2494 = vpop.f32.mrb[0].mxu0
    %v2495 = vadd.f32 %v2422, %v2494
    %v2496 = vpop.f32.mrb[0].mxu0
    %v2497 = vadd.f32 %v2424, %v2496
    %2498 = vmatprep.mubr.bf16.mxu0 %v1572
    %2499 = vmatmul.mubr.bf16.gmra.mrb[0].mxu0 %v1571
    %v2500 = vpop.f32.mrb[0].mxu0
    %v2501 = vadd.f32 %v2428, %v2500
    %v2502 = vpop.f32.mrb[0].mxu0
    %v2503 = vadd.f32 %v2430, %v2502
    %v2504 = vpop.f32.mrb[0].mxu0
    %v2505 = vadd.f32 %v2432, %v2504
    %v2506 = vpop.f32.mrb[0].mxu0
    %v2507 = vadd.f32 %v2434, %v2506
    %2508 = vdwg.mxu0
    %2509 = vmatprep.subr.bf16.mxu0 %v2110
    %2510 = vmatpush1.bf16.msra.mxu0 %v2109
    %2511 = vmatprep.subr.bf16.mxu0 %v2114
    %2512 = vmatpush1.bf16.msra.mxu0 %v2113
    %2513 = vmatprep.subr.bf16.mxu0 %v2118
    %2514 = vmatpush1.bf16.msra.mxu0 %v2117
    %2515 = vmatprep.subr.bf16.mxu0 %v2122
    %2516 = vmatpush1.bf16.msra.mxu0 %v2121
    %2517 = vmatprep.subr.bf16.mxu0 %v2126
    %2518 = vmatpush1.bf16.msra.mxu0 %v2125
    %2519 = vmatprep.subr.bf16.mxu0 %v2130
    %2520 = vmatpush1.bf16.msra.mxu0 %v2129
    %2521 = vmatprep.subr.bf16.mxu0 %v2134
    %2522 = vmatpush1.bf16.msra.mxu0 %v2133
    %2523 = vmatprep.subr.bf16.mxu0 %v2138
    %2524 = vmatpush1.bf16.msra.mxu0 %v2137
    %2525 = vmatprep.subr.bf16.mxu0 %v2142
    %2526 = vmatpush1.bf16.msra.mxu0 %v2141
    %2527 = vmatprep.subr.bf16.mxu0 %v2146
    %2528 = vmatpush1.bf16.msra.mxu0 %v2145
    %2529 = vmatprep.subr.bf16.mxu0 %v2150
    %2530 = vmatpush1.bf16.msra.mxu0 %v2149
    %2531 = vmatprep.subr.bf16.mxu0 %v2154
    %2532 = vmatpush1.bf16.msra.mxu0 %v2153
    %2533 = vmatprep.subr.bf16.mxu0 %v2158
    %2534 = vmatpush1.bf16.msra.mxu0 %v2157
    %2535 = vmatprep.subr.bf16.mxu0 %v2162
    %2536 = vmatpush1.bf16.msra.mxu0 %v2161
    %2537 = vmatprep.subr.bf16.mxu0 %v2166
    %2538 = vmatpush1.bf16.msra.mxu0 %v2165
    %2539 = vmatprep.subr.bf16.mxu0 %v2170
    %2540 = vmatpush1.bf16.msra.mxu0 %v2169
    %2541 = vmatprep.mubr.bf16.mxu0 %v1558
    %2542 = vmatmul.mubr.bf16.gmra.mrb[0].mxu0 %v1557
    %v2543 = vpop.f32.mrb[0].mxu0
    %v2544 = vadd.f32 %v1714, %v2543
    %v2545 = vpop.f32.mrb[0].mxu0
    %v2546 = vadd.f32 %v1718, %v2545
    %v2547 = vpop.f32.mrb[0].mxu0
    %v2548 = vadd.f32 %v1714, %v2547
    %v2549 = vpop.f32.mrb[0].mxu0
    %v2550 = vadd.f32 %v1718, %v2549
    %2551 = vmatprep.mubr.bf16.mxu0 %v1562
    %2552 = vmatmul.mubr.bf16.gmra.mrb[0].mxu0 %v1561
    %v2553 = vpop.f32.mrb[0].mxu0
    %v2554 = vadd.f32 %v1714, %v2553
    %v2555 = vpop.f32.mrb[0].mxu0
    %v2556 = vadd.f32 %v1718, %v2555
    %v2557 = vpop.f32.mrb[0].mxu0
    %v2558 = vadd.f32 %v1714, %v2557
    %v2559 = vpop.f32.mrb[0].mxu0
    %v2560 = vadd.f32 %v1718, %v2559
    %2561 = vmatprep.mubr.bf16.mxu0 %v1566
    %2562 = vmatmul.mubr.bf16.gmra.mrb[0].mxu0 %v1565
    %v2563 = vpop.f32.mrb[0].mxu0
    %v2564 = vadd.f32 %v1714, %v2563
    %v2565 = vpop.f32.mrb[0].mxu0
    %v2566 = vadd.f32 %v1718, %v2565
    %v2567 = vpop.f32.mrb[0].mxu0
    %v2568 = vadd.f32 %v1714, %v2567
    %v2569 = vpop.f32.mrb[0].mxu0
    %v2570 = vadd.f32 %v1718, %v2569
    %2571 = vmatprep.mubr.bf16.mxu0 %v1570
    %2572 = vmatmul.mubr.bf16.gmra.mrb[0].mxu0 %v1569
    %v2573 = vpop.f32.mrb[0].mxu0
    %v2574 = vadd.f32 %v1714, %v2573
    %v2575 = vpop.f32.mrb[0].mxu0
    %v2576 = vadd.f32 %v1718, %v2575
    %v2577 = vpop.f32.mrb[0].mxu0
    %v2578 = vadd.f32 %v1714, %v2577
    %v2579 = vpop.f32.mrb[0].mxu0
    %v2580 = vadd.f32 %v1718, %v2579
    %2581 = vdwg.mxu0
    %2582 = vmatprep.subr.bf16.mxu0 %v2174
    %2583 = vmatpush1.bf16.msra.mxu0 %v2173
    %2584 = vmatprep.subr.bf16.mxu0 %v2178
    %2585 = vmatpush1.bf16.msra.mxu0 %v2177
    %2586 = vmatprep.subr.bf16.mxu0 %v2182
    %2587 = vmatpush1.bf16.msra.mxu0 %v2181
    %2588 = vmatprep.subr.bf16.mxu0 %v2186
    %2589 = vmatpush1.bf16.msra.mxu0 %v2185
    %2590 = vmatprep.subr.bf16.mxu0 %v2190
    %2591 = vmatpush1.bf16.msra.mxu0 %v2189
    %2592 = vmatprep.subr.bf16.mxu0 %v2194
    %2593 = vmatpush1.bf16.msra.mxu0 %v2193
    %2594 = vmatprep.subr.bf16.mxu0 %v2198
    %2595 = vmatpush1.bf16.msra.mxu0 %v2197
    %2596 = vmatprep.subr.bf16.mxu0 %v2202
    %2597 = vmatpush1.bf16.msra.mxu0 %v2201
    %2598 = vmatprep.subr.bf16.mxu0 %v2206
    %2599 = vmatpush1.bf16.msra.mxu0 %v2205
    %2600 = vmatprep.subr.bf16.mxu0 %v2210
    %2601 = vmatpush1.bf16.msra.mxu0 %v2209
    %2602 = vmatprep.subr.bf16.mxu0 %v2214
    %2603 = vmatpush1.bf16.msra.mxu0 %v2213
    %2604 = vmatprep.subr.bf16.mxu0 %v2218
    %2605 = vmatpush1.bf16.msra.mxu0 %v2217
    %2606 = vmatprep.subr.bf16.mxu0 %v2222
    %2607 = vmatpush1.bf16.msra.mxu0 %v2221
    %2608 = vmatprep.subr.bf16.mxu0 %v2226
    %2609 = vmatpush1.bf16.msra.mxu0 %v2225
    %2610 = vmatprep.subr.bf16.mxu0 %v2230
    %2611 = vmatpush1.bf16.msra.mxu0 %v2229
    %2612 = vmatprep.subr.bf16.mxu0 %v2234
    %2613 = vmatpush1.bf16.msra.mxu0 %v2233
    %2614 = vmatprep.mubr.bf16.mxu0 %v1560
    %2615 = vmatmul.mubr.bf16.gmra.mrb[0].mxu0 %v1559
    %v2616 = vpop.f32.mrb[0].mxu0
    %v2617 = vadd.f32 %v2544, %v2616
    %v2618 = vpop.f32.mrb[0].mxu0
    %v2619 = vadd.f32 %v2546, %v2618
    %v2620 = vpop.f32.mrb[0].mxu0
    %v2621 = vadd.f32 %v2548, %v2620
    %v2622 = vpop.f32.mrb[0].mxu0
    %v2623 = vadd.f32 %v2550, %v2622
    %2624 = vmatprep.mubr.bf16.mxu0 %v1564
    %2625 = vmatmul.mubr.bf16.gmra.mrb[0].mxu0 %v1563
    %v2626 = vpop.f32.mrb[0].mxu0
    %v2627 = vadd.f32 %v2554, %v2626
    %v2628 = vpop.f32.mrb[0].mxu0
    %v2629 = vadd.f32 %v2556, %v2628
    %v2630 = vpop.f32.mrb[0].mxu0
    %v2631 = vadd.f32 %v2558, %v2630
    %v2632 = vpop.f32.mrb[0].mxu0
    %v2633 = vadd.f32 %v2560, %v2632
    %2634 = vmatprep.mubr.bf16.mxu0 %v1568
    %2635 = vmatmul.mubr.bf16.gmra.mrb[0].mxu0 %v1567
    %v2636 = vpop.f32.mrb[0].mxu0
    %v2637 = vadd.f32 %v2564, %v2636
    %v2638 = vpop.f32.mrb[0].mxu0
    %v2639 = vadd.f32 %v2566, %v2638
    %v2640 = vpop.f32.mrb[0].mxu0
    %v2641 = vadd.f32 %v2568, %v2640
    %v2642 = vpop.f32.mrb[0].mxu0
    %v2643 = vadd.f32 %v2570, %v2642
    %2644 = vmatprep.mubr.bf16.mxu0 %v1572
    %2645 = vmatmul.mubr.bf16.gmra.mrb[0].mxu0 %v1571
    %v2646 = vpop.f32.mrb[0].mxu0
    %v2647 = vadd.f32 %v2574, %v2646
    %v2648 = vpop.f32.mrb[0].mxu0
    %v2649 = vadd.f32 %v2576, %v2648
    %v2650 = vpop.f32.mrb[0].mxu0
    %v2651 = vadd.f32 %v2578, %v2650
    %v2652 = vpop.f32.mrb[0].mxu0
    %v2653 = vadd.f32 %v2580, %v2652
    %2654 = vdwg.mxu0
    %v2655 = vmax.f32 %v2471, 0.0
    %v2656 = vmax.f32 %v2473, 0.0
    %v2657 = vmax.f32 %v2617, 0.0
    %v2658 = vmax.f32 %v2619, 0.0
    %v2659 = vmax.f32 %v2475, 0.0
    %v2660 = vmax.f32 %v2477, 0.0
    %v2661 = vmax.f32 %v2621, 0.0
    %v2662 = vmax.f32 %v2623, 0.0
    %v2663 = vmax.f32 %v2481, 0.0
    %v2664 = vmax.f32 %v2483, 0.0
    %v2665 = vmax.f32 %v2627, 0.0
    %v2666 = vmax.f32 %v2629, 0.0
    %v2667 = vmax.f32 %v2485, 0.0
    %v2668 = vmax.f32 %v2487, 0.0
    %v2669 = vmax.f32 %v2631, 0.0
    %v2670 = vmax.f32 %v2633, 0.0
    %v2671 = vmax.f32 %v2491, 0.0
    %v2672 = vmax.f32 %v2493, 0.0
    %v2673 = vmax.f32 %v2637, 0.0
    %v2674 = vmax.f32 %v2639, 0.0
    %v2675 = vmax.f32 %v2495, 0.0
    %v2676 = vmax.f32 %v2497, 0.0
    %v2677 = vmax.f32 %v2641, 0.0
    %v2678 = vmax.f32 %v2643, 0.0
    %v2679 = vmax.f32 %v2501, 0.0
    %v2680 = vmax.f32 %v2503, 0.0
    %v2681 = vmax.f32 %v2647, 0.0
    %v2682 = vmax.f32 %v2649, 0.0
    %v2683 = vmax.f32 %v2505, 0.0
    %v2684 = vmax.f32 %v2507, 0.0
    %v2685 = vmax.f32 %v2651, 0.0
    %v2686 = vmax.f32 %v2653, 0.0
    %v2687 = vpack.c.bf16 %v2659, %v2655
    %v2688 = vpack.c.bf16 %v2660, %v2656
    %v2689 = vpack.c.bf16 %v2661, %v2657
    %v2690 = vpack.c.bf16 %v2662, %v2658
    %v2691 = vpack.c.bf16 %v2667, %v2663
    %v2692 = vpack.c.bf16 %v2668, %v2664
    %v2693 = vpack.c.bf16 %v2669, %v2665
    %v2694 = vpack.c.bf16 %v2670, %v2666
    %v2695 = vpack.c.bf16 %v2675, %v2671
    %v2696 = vpack.c.bf16 %v2676, %v2672
    %v2697 = vpack.c.bf16 %v2677, %v2673
    %v2698 = vpack.c.bf16 %v2678, %v2674
    %v2699 = vpack.c.bf16 %v2683, %v2679
    %v2700 = vpack.c.bf16 %v2684, %v2680
    %v2701 = vpack.c.bf16 %v2685, %v2681
    %v2702 = vpack.c.bf16 %v2686, %v2682
    %v2703 = vld [vmem:[#allocation8] sm:$0xf]
    %v2704 = vld [vmem:[#allocation8 + $0x4] sm:$0xf]
    %v2705 = vld [vmem:[#allocation8 + $0x8] sm:$0xf]
    %v2706 = vld [vmem:[#allocation8 + $0xc] sm:$0xf]
    %v2707 = vld [vmem:[#allocation8 + $0x10] sm:$0xf]
    %v2708 = vld [vmem:[#allocation8 + $0x14] sm:$0xf]
    %v2709 = vld [vmem:[#allocation8 + $0x18] sm:$0xf]
    %v2710 = vld [vmem:[#allocation8 + $0x1c] sm:$0xf]
    %v2711 = vld [vmem:[#allocation8 + $0x20] sm:$0xf]
    %v2712 = vld [vmem:[#allocation8 + $0x24] sm:$0xf]
    %v2713 = vld [vmem:[#allocation8 + $0x28] sm:$0xf]
    %v2714 = vld [vmem:[#allocation8 + $0x2c] sm:$0xf]
    %v2715 = vld [vmem:[#allocation8 + $0x30] sm:$0xf]
    %v2716 = vld [vmem:[#allocation8 + $0x34] sm:$0xf]
    %v2717 = vld [vmem:[#allocation8 + $0x38] sm:$0xf]
    %v2718 = vld [vmem:[#allocation8 + $0x3c] sm:$0xf]
    %v2719 = vld [vmem:[#allocation8 + $0x40] sm:$0xf]
    %v2720 = vld [vmem:[#allocation8 + $0x44] sm:$0xf]
    %v2721 = vld [vmem:[#allocation8 + $0x48] sm:$0xf]
    %v2722 = vld [vmem:[#allocation8 + $0x4c] sm:$0xf]
    %v2723 = vld [vmem:[#allocation8 + $0x50] sm:$0xf]
    %v2724 = vld [vmem:[#allocation8 + $0x54] sm:$0xf]
    %v2725 = vld [vmem:[#allocation8 + $0x58] sm:$0xf]
    %v2726 = vld [vmem:[#allocation8 + $0x5c] sm:$0xf]
    %v2727 = vld [vmem:[#allocation8 + $0x60] sm:$0xf]
    %v2728 = vld [vmem:[#allocation8 + $0x64] sm:$0xf]
    %v2729 = vld [vmem:[#allocation8 + $0x68] sm:$0xf]
    %v2730 = vld [vmem:[#allocation8 + $0x6c] sm:$0xf]
    %v2731 = vld [vmem:[#allocation8 + $0x70] sm:$0xf]
    %v2732 = vld [vmem:[#allocation8 + $0x74] sm:$0xf]
    %v2733 = vld [vmem:[#allocation8 + $0x78] sm:$0xf]
    %v2734 = vld [vmem:[#allocation8 + $0x7c] sm:$0xf]
    %v2735 = vld [vmem:[#allocation8 + $0x80] sm:$0xf]
    %v2736 = vld [vmem:[#allocation8 + $0x84] sm:$0xf]
    %v2737 = vld [vmem:[#allocation8 + $0x88] sm:$0xf]
    %v2738 = vld [vmem:[#allocation8 + $0x8c] sm:$0xf]
    %v2739 = vld [vmem:[#allocation8 + $0x90] sm:$0xf]
    %v2740 = vld [vmem:[#allocation8 + $0x94] sm:$0xf]
    %v2741 = vld [vmem:[#allocation8 + $0x98] sm:$0xf]
    %v2742 = vld [vmem:[#allocation8 + $0x9c] sm:$0xf]
    %v2743 = vld [vmem:[#allocation8 + $0xa0] sm:$0xf]
    %v2744 = vld [vmem:[#allocation8 + $0xa4] sm:$0xf]
    %v2745 = vld [vmem:[#allocation8 + $0xa8] sm:$0xf]
    %v2746 = vld [vmem:[#allocation8 + $0xac] sm:$0xf]
    %v2747 = vld [vmem:[#allocation8 + $0xb0] sm:$0xf]
    %v2748 = vld [vmem:[#allocation8 + $0xb4] sm:$0xf]
    %v2749 = vld [vmem:[#allocation8 + $0xb8] sm:$0xf]
    %v2750 = vld [vmem:[#allocation8 + $0xbc] sm:$0xf]
    %v2751 = vld [vmem:[#allocation8 + $0xc0] sm:$0xf]
    %v2752 = vld [vmem:[#allocation8 + $0xc4] sm:$0xf]
    %v2753 = vld [vmem:[#allocation8 + $0xc8] sm:$0xf]
    %v2754 = vld [vmem:[#allocation8 + $0xcc] sm:$0xf]
    %v2755 = vld [vmem:[#allocation8 + $0xd0] sm:$0xf]
    %v2756 = vld [vmem:[#allocation8 + $0xd4] sm:$0xf]
    %v2757 = vld [vmem:[#allocation8 + $0xd8] sm:$0xf]
    %v2758 = vld [vmem:[#allocation8 + $0xdc] sm:$0xf]
    %v2759 = vld [vmem:[#allocation8 + $0xe0] sm:$0xf]
    %v2760 = vld [vmem:[#allocation8 + $0xe4] sm:$0xf]
    %v2761 = vld [vmem:[#allocation8 + $0xe8] sm:$0xf]
    %v2762 = vld [vmem:[#allocation8 + $0xec] sm:$0xf]
    %v2763 = vld [vmem:[#allocation8 + $0xf0] sm:$0xf]
    %v2764 = vld [vmem:[#allocation8 + $0xf4] sm:$0xf]
    %v2765 = vld [vmem:[#allocation8 + $0xf8] sm:$0xf]
    %v2766 = vld [vmem:[#allocation8 + $0xfc] sm:$0xf]
    %v2767 = vld [vmem:[%s8] sm:$0x1]
    %v2769 = vlaneseq
    %v2770 = vshrl.u32 %v2769, 7
    %v2771 = vsub.s32 0, %v2770
    %v2772 = vrot.slane %v2767, %v2771
    %v2838 = vunpack.c.l.b16 %v2703
    %v2839 = vunpack.c.l.b16 %v2704
    %v2840 = vunpack.c.l.b16 %v2705
    %v2841 = vunpack.c.l.b16 %v2706
    %v2842 = vunpack.c.l.b16 %v2707
    %v2843 = vunpack.c.l.b16 %v2708
    %v2844 = vunpack.c.l.b16 %v2709
    %v2845 = vunpack.c.l.b16 %v2710
    %v2846 = vunpack.c.l.b16 %v2711
    %v2847 = vunpack.c.l.b16 %v2712
    %v2848 = vunpack.c.l.b16 %v2713
    %v2849 = vunpack.c.l.b16 %v2714
    %v2850 = vunpack.c.l.b16 %v2715
    %v2851 = vunpack.c.l.b16 %v2716
    %v2852 = vunpack.c.l.b16 %v2717
    %v2853 = vunpack.c.l.b16 %v2718
    %v2854 = vunpack.c.l.b16 %v2719
    %v2855 = vunpack.c.l.b16 %v2720
    %v2856 = vunpack.c.l.b16 %v2721
    %v2857 = vunpack.c.l.b16 %v2722
    %v2858 = vunpack.c.l.b16 %v2723
    %v2859 = vunpack.c.l.b16 %v2724
    %v2860 = vunpack.c.l.b16 %v2725
    %v2861 = vunpack.c.l.b16 %v2726
    %v2862 = vunpack.c.l.b16 %v2727
    %v2863 = vunpack.c.l.b16 %v2728
    %v2864 = vunpack.c.l.b16 %v2729
    %v2865 = vunpack.c.l.b16 %v2730
    %v2866 = vunpack.c.l.b16 %v2731
    %v2867 = vunpack.c.l.b16 %v2732
    %v2868 = vunpack.c.l.b16 %v2733
    %v2869 = vunpack.c.l.b16 %v2734
    %v2870 = vunpack.c.l.b16 %v2735
    %v2871 = vunpack.c.l.b16 %v2736
    %v2872 = vunpack.c.l.b16 %v2737
    %v2873 = vunpack.c.l.b16 %v2738
    %v2874 = vunpack.c.l.b16 %v2739
    %v2875 = vunpack.c.l.b16 %v2740
    %v2876 = vunpack.c.l.b16 %v2741
    %v2877 = vunpack.c.l.b16 %v2742
    %v2878 = vunpack.c.l.b16 %v2743
    %v2879 = vunpack.c.l.b16 %v2744
    %v2880 = vunpack.c.l.b16 %v2745
    %v2881 = vunpack.c.l.b16 %v2746
    %v2882 = vunpack.c.l.b16 %v2747
    %v2883 = vunpack.c.l.b16 %v2748
    %v2884 = vunpack.c.l.b16 %v2749
    %v2885 = vunpack.c.l.b16 %v2750
    %v2886 = vunpack.c.l.b16 %v2751
    %v2887 = vunpack.c.l.b16 %v2752
    %v2888 = vunpack.c.l.b16 %v2753
    %v2889 = vunpack.c.l.b16 %v2754
    %v2890 = vunpack.c.l.b16 %v2755
    %v2891 = vunpack.c.l.b16 %v2756
    %v2892 = vunpack.c.l.b16 %v2757
    %v2893 = vunpack.c.l.b16 %v2758
    %v2894 = vunpack.c.l.b16 %v2759
    %v2895 = vunpack.c.l.b16 %v2760
    %v2896 = vunpack.c.l.b16 %v2761
    %v2897 = vunpack.c.l.b16 %v2762
    %v2898 = vunpack.c.l.b16 %v2763
    %v2899 = vunpack.c.l.b16 %v2764
    %v2900 = vunpack.c.l.b16 %v2765
    %v2901 = vunpack.c.l.b16 %v2766
    %v2902 = vpack.c.b16 %v2839, %v2838
    %v2903 = vpack.c.b16 %v2841, %v2840
    %v2904 = vpack.c.b16 %v2843, %v2842
    %v2905 = vpack.c.b16 %v2845, %v2844
    %v2906 = vpack.c.b16 %v2847, %v2846
    %v2907 = vpack.c.b16 %v2849, %v2848
    %v2908 = vpack.c.b16 %v2851, %v2850
    %v2909 = vpack.c.b16 %v2853, %v2852
    %v2910 = vpack.c.b16 %v2855, %v2854
    %v2911 = vpack.c.b16 %v2857, %v2856
    %v2912 = vpack.c.b16 %v2859, %v2858
    %v2913 = vpack.c.b16 %v2861, %v2860
    %v2914 = vpack.c.b16 %v2863, %v2862
    %v2915 = vpack.c.b16 %v2865, %v2864
    %v2916 = vpack.c.b16 %v2867, %v2866
    %v2917 = vpack.c.b16 %v2869, %v2868
    %v2918 = vpack.c.b16 %v2871, %v2870
    %v2919 = vpack.c.b16 %v2873, %v2872
    %v2920 = vpack.c.b16 %v2875, %v2874
    %v2921 = vpack.c.b16 %v2877, %v2876
    %v2922 = vpack.c.b16 %v2879, %v2878
    %v2923 = vpack.c.b16 %v2881, %v2880
    %v2924 = vpack.c.b16 %v2883, %v2882
    %v2925 = vpack.c.b16 %v2885, %v2884
    %v2926 = vpack.c.b16 %v2887, %v2886
    %v2927 = vpack.c.b16 %v2889, %v2888
    %v2928 = vpack.c.b16 %v2891, %v2890
    %v2929 = vpack.c.b16 %v2893, %v2892
    %v2930 = vpack.c.b16 %v2895, %v2894
    %v2931 = vpack.c.b16 %v2897, %v2896
    %v2932 = vpack.c.b16 %v2899, %v2898
    %v2933 = vpack.c.b16 %v2901, %v2900
    %2966 = vmatprep.subr.bf16.mxu0 0
    %2967 = vmatpush1.bf16.msra.mxu0 %v2902
    %2968 = vmatprep.subr.bf16.mxu0 0
    %2969 = vmatpush1.bf16.msra.mxu0 %v2903
    %2970 = vmatprep.subr.bf16.mxu0 0
    %2971 = vmatpush1.bf16.msra.mxu0 %v2904
    %2972 = vmatprep.subr.bf16.mxu0 0
    %2973 = vmatpush1.bf16.msra.mxu0 %v2905
    %2974 = vmatprep.subr.bf16.mxu0 0
    %2975 = vmatpush1.bf16.msra.mxu0 %v2906
    %2976 = vmatprep.subr.bf16.mxu0 0
    %2977 = vmatpush1.bf16.msra.mxu0 %v2907
    %2978 = vmatprep.subr.bf16.mxu0 0
    %2979 = vmatpush1.bf16.msra.mxu0 %v2908
    %2980 = vmatprep.subr.bf16.mxu0 0
    %2981 = vmatpush1.bf16.msra.mxu0 %v2909
    %2982 = vmatprep.subr.bf16.mxu0 0
    %2983 = vmatpush1.bf16.msra.mxu0 %v2910
    %2984 = vmatprep.subr.bf16.mxu0 0
    %2985 = vmatpush1.bf16.msra.mxu0 %v2911
    %2986 = vmatprep.subr.bf16.mxu0 0
    %2987 = vmatpush1.bf16.msra.mxu0 %v2912
    %2988 = vmatprep.subr.bf16.mxu0 0
    %2989 = vmatpush1.bf16.msra.mxu0 %v2913
    %2990 = vmatprep.subr.bf16.mxu0 0
    %2991 = vmatpush1.bf16.msra.mxu0 %v2914
    %2992 = vmatprep.subr.bf16.mxu0 0
    %2993 = vmatpush1.bf16.msra.mxu0 %v2915
    %2994 = vmatprep.subr.bf16.mxu0 0
    %2995 = vmatpush1.bf16.msra.mxu0 %v2916
    %2996 = vmatprep.subr.bf16.mxu0 0
    %2997 = vmatpush1.bf16.msra.mxu0 %v2917
    %2998 = vmatprep.mubr.bf16.mxu0 %v2688
    %2999 = vmatmul.mubr.bf16.gmra.mrb[0].mxu0 %v2687
    %v3000 = vpop.f32.mrb[0].mxu0
    %v3001 = vadd.f32 %v2772, %v3000
    %v3002 = vpop.f32.mrb[0].mxu0
    %v3003 = vpop.f32.mrb[0].mxu0
    %v3004 = vadd.f32 %v2772, %v3003
    %v3005 = vpop.f32.mrb[0].mxu0
    %3006 = vmatprep.mubr.bf16.mxu0 %v2692
    %3007 = vmatmul.mubr.bf16.gmra.mrb[0].mxu0 %v2691
    %v3008 = vpop.f32.mrb[0].mxu0
    %v3009 = vadd.f32 %v2772, %v3008
    %v3010 = vpop.f32.mrb[0].mxu0
    %v3011 = vpop.f32.mrb[0].mxu0
    %v3012 = vadd.f32 %v2772, %v3011
    %v3013 = vpop.f32.mrb[0].mxu0
    %3014 = vmatprep.mubr.bf16.mxu0 %v2696
    %3015 = vmatmul.mubr.bf16.gmra.mrb[0].mxu0 %v2695
    %v3016 = vpop.f32.mrb[0].mxu0
    %v3017 = vadd.f32 %v2772, %v3016
    %v3018 = vpop.f32.mrb[0].mxu0
    %v3019 = vpop.f32.mrb[0].mxu0
    %v3020 = vadd.f32 %v2772, %v3019
    %v3021 = vpop.f32.mrb[0].mxu0
    %3022 = vmatprep.mubr.bf16.mxu0 %v2700
    %3023 = vmatmul.mubr.bf16.gmra.mrb[0].mxu0 %v2699
    %v3024 = vpop.f32.mrb[0].mxu0
    %v3025 = vadd.f32 %v2772, %v3024
    %v3026 = vpop.f32.mrb[0].mxu0
    %v3027 = vpop.f32.mrb[0].mxu0
    %v3028 = vadd.f32 %v2772, %v3027
    %v3029 = vpop.f32.mrb[0].mxu0
    %3030 = vdwg.mxu0
    %3031 = vmatprep.subr.bf16.mxu0 0
    %3032 = vmatpush1.bf16.msra.mxu0 %v2918
    %3033 = vmatprep.subr.bf16.mxu0 0
    %3034 = vmatpush1.bf16.msra.mxu0 %v2919
    %3035 = vmatprep.subr.bf16.mxu0 0
    %3036 = vmatpush1.bf16.msra.mxu0 %v2920
    %3037 = vmatprep.subr.bf16.mxu0 0
    %3038 = vmatpush1.bf16.msra.mxu0 %v2921
    %3039 = vmatprep.subr.bf16.mxu0 0
    %3040 = vmatpush1.bf16.msra.mxu0 %v2922
    %3041 = vmatprep.subr.bf16.mxu0 0
    %3042 = vmatpush1.bf16.msra.mxu0 %v2923
    %3043 = vmatprep.subr.bf16.mxu0 0
    %3044 = vmatpush1.bf16.msra.mxu0 %v2924
    %3045 = vmatprep.subr.bf16.mxu0 0
    %3046 = vmatpush1.bf16.msra.mxu0 %v2925
    %3047 = vmatprep.subr.bf16.mxu0 0
    %3048 = vmatpush1.bf16.msra.mxu0 %v2926
    %3049 = vmatprep.subr.bf16.mxu0 0
    %3050 = vmatpush1.bf16.msra.mxu0 %v2927
    %3051 = vmatprep.subr.bf16.mxu0 0
    %3052 = vmatpush1.bf16.msra.mxu0 %v2928
    %3053 = vmatprep.subr.bf16.mxu0 0
    %3054 = vmatpush1.bf16.msra.mxu0 %v2929
    %3055 = vmatprep.subr.bf16.mxu0 0
    %3056 = vmatpush1.bf16.msra.mxu0 %v2930
    %3057 = vmatprep.subr.bf16.mxu0 0
    %3058 = vmatpush1.bf16.msra.mxu0 %v2931
    %3059 = vmatprep.subr.bf16.mxu0 0
    %3060 = vmatpush1.bf16.msra.mxu0 %v2932
    %3061 = vmatprep.subr.bf16.mxu0 0
    %3062 = vmatpush1.bf16.msra.mxu0 %v2933
    %3063 = vmatprep.mubr.bf16.mxu0 %v2690
    %3064 = vmatmul.mubr.bf16.gmra.mrb[0].mxu0 %v2689
    %v3065 = vpop.f32.mrb[0].mxu0
    %v3066 = vadd.f32 %v3001, %v3065
    %v3067 = vpop.f32.mrb[0].mxu0
    %v3068 = vpop.f32.mrb[0].mxu0
    %v3069 = vadd.f32 %v3004, %v3068
    %v3070 = vpop.f32.mrb[0].mxu0
    %3071 = vmatprep.mubr.bf16.mxu0 %v2694
    %3072 = vmatmul.mubr.bf16.gmra.mrb[0].mxu0 %v2693
    %v3073 = vpop.f32.mrb[0].mxu0
    %v3074 = vadd.f32 %v3009, %v3073
    %v3075 = vpop.f32.mrb[0].mxu0
    %v3076 = vpop.f32.mrb[0].mxu0
    %v3077 = vadd.f32 %v3012, %v3076
    %v3078 = vpop.f32.mrb[0].mxu0
    %3079 = vmatprep.mubr.bf16.mxu0 %v2698
    %3080 = vmatmul.mubr.bf16.gmra.mrb[0].mxu0 %v2697
    %v3081 = vpop.f32.mrb[0].mxu0
    %v3082 = vadd.f32 %v3017, %v3081
    %v3083 = vpop.f32.mrb[0].mxu0
    %v3084 = vpop.f32.mrb[0].mxu0
    %v3085 = vadd.f32 %v3020, %v3084
    %v3086 = vpop.f32.mrb[0].mxu0
    %3087 = vmatprep.mubr.bf16.mxu0 %v2702
    %3088 = vmatmul.mubr.bf16.gmra.mrb[0].mxu0 %v2701
    %v3089 = vpop.f32.mrb[0].mxu0
    %v3090 = vadd.f32 %v3025, %v3089
    %v3091 = vpop.f32.mrb[0].mxu0
    %v3092 = vpop.f32.mrb[0].mxu0
    %v3093 = vadd.f32 %v3028, %v3092
    %v3094 = vpop.f32.mrb[0].mxu0
    %3095 = vdwg.mxu0
    %3096 = vst [vmem:[#allocation10] sm:$0xff] %v3066
    %3097 = vst [vmem:[#allocation10 + $0x8] sm:$0xff] %v3069
    %3098 = vst [vmem:[#allocation10 + $0x10] sm:$0xff] %v3074
    %3099 = vst [vmem:[#allocation10 + $0x18] sm:$0xff] %v3077
    %3100 = vst [vmem:[#allocation10 + $0x20] sm:$0xff] %v3082
    %3101 = vst [vmem:[#allocation10 + $0x28] sm:$0xff] %v3085
    %3102 = vst [vmem:[#allocation10 + $0x30] sm:$0xff] %v3090
    %3103 = vst [vmem:[#allocation10 + $0x38] sm:$0xff] %v3093
    // Predicated region
    $region54: #{tpu_custom_call.1} parent=1 // pred_check
      _
    $region55: #{tpu_custom_call.1} parent=1 // pred_check_branch
      %3105 = sbr.rel (0) target = $region57
    $region56: #{tpu_custom_call.1} parent=1 // pred_region
      %s3107 = ssub.s32 1024, 1024
      %3108 = vsyncadd [#allocation4], %s3107
      %s3109 = sshll.u32 [#allocation10], 4
      %s3110 = int_to_ptr.vmem [resolvable:$true] %s3109
      %3115 = dma.vmem_to_hbm [thread:$0]  %s3110, 1024, %s9, [#allocation4], 128, 128, 8
    $region57: #{tpu_custom_call.1} parent=1 // pred_fallthru
      _
    // Predicated region
    $region58: #{tpu_custom_call.1} parent=1 // pred_check
      _
    $region59: #{tpu_custom_call.1} parent=1 // pred_check_branch
      %3117 = sbr.rel (0) target = $region61
    $region60: #{tpu_custom_call.1} parent=1 // pred_region
      %3118 = dma.done [#allocation4], 1024
    $region61: #{tpu_custom_call.1} parent=1 // pred_fallthru
      _
    %3119 = vsyncpa [#allocation3], 1
    %3120 = vsyncpa [#allocation6], 1
    %3121 = vsyncpa [#allocation9], 1
    %3122 = vsyncpa [#allocation4], 1

</llo_original>
